<compile_context>
chip_gen: v5e
topology: v5e:2x2
jax: 0.10.0
libtpu: 0.0.40
codegen_flags: <defaults>
</compile_context>

<pallas_src>
import numpy as np
import jax
import jax.numpy as jnp
from jax.experimental import pallas as pl
from jax.experimental.pallas import tpu as pltpu

EPS_BN = 1e-5   # PyTorch BatchNorm2d default eps


def _vmem_limit_bytes(*shaped):
    """Scoped-VMEM limit from the actual block footprint (+ headroom), kept
    inside the window that is safe on v5e/v6e (128 MiB) and v7x (64 MiB)."""
    total = 0
    for a in shaped:
        total += int(np.prod(a.shape)) * np.dtype(a.dtype).itemsize
    return int(min(max(4 * total, 8 << 20), 32 << 20))


# ---------------------------------------------------------------------------
# Kernel 1: fused [BN-apply of previous stage] -> 3x3 conv (3 banded MXU
#           matmuls, kx taps + W zero-padding folded into the weights)
#           -> ReLU -> [BN sum / sum-of-squares reduction].
# Single grid step: the whole (tiny) batch is one matmul M dimension.
# ---------------------------------------------------------------------------
def _conv_stage_kernel(x_ref, p_ref, w_ref, y_ref, stats_ref):
    # x_ref:     (B, H, W*Cin)        f32 (stage 0) / bf16   previous activation
    # p_ref:     (3, W*Cin)           f32  lane-tiled [mean, gamma*rsqrt(var+eps), beta]
    # w_ref:     (3, W*Cin, W*Cout)   bf16 banded conv matrices, one per ky
    # y_ref:     (B, H, W*Cout)       bf16 post-ReLU (pre-BN) activation, lane-dense
    # stats_ref: (2, W*Cout)          f32  [sum, sumsq] reduced over (B, H)
    B, H, Lin = x_ref.shape
    Lout = y_ref.shape[2]

    # ---- fused BN prologue (identity params for stage 0), f32 math ----
    x = x_ref[...].astype(jnp.float32)
    xn = (x - p_ref[0, :]) * p_ref[1, :] + p_ref[2, :]

    # ---- zero-pad rows (H axis) only; W padding lives in the banded weights ----
    zrow = jnp.zeros((B, 1, Lin), jnp.float32)
    xp = jnp.concatenate([zrow, xn, zrow], axis=1)            # (B, H+2, W*Cin)

    # ---- 3 banded matmuls (one per ky), bf16 operands, f32 accumulate ----
    y = None
    for ky in range(3):
        lhs = xp[:, ky:ky + H, :].reshape(B * H, Lin).astype(jnp.bfloat16)
        part = jnp.dot(lhs, w_ref[ky], preferred_element_type=jnp.float32)
        y = part if y is None else y + part
    y = jnp.maximum(y, 0.0)                                   # ReLU (f32), (B*H, W*Cout)

    # lane-dense (128-lane) bf16 store of the activation
    y_ref[...] = y.reshape(B, H, Lout).astype(jnp.bfloat16)

    # ---- BN statistics from the f32 values (pre bf16 cast); the W-fold to
    #      per-channel stats is done (cheaply) by the wrapper ----
    s1 = jnp.sum(y, axis=0, keepdims=True)                    # (1, W*Cout)
    s2 = jnp.sum(y * y, axis=0, keepdims=True)
    stats_ref[...] = jnp.concatenate([s1, s2], axis=0)


def conv_stage(act, bn_p, w_band):
    B, H, Lin = act.shape
    Lout = w_band.shape[2]
    out_shape = (jax.ShapeDtypeStruct((B, H, Lout), jnp.bfloat16),
                 jax.ShapeDtypeStruct((2, Lout), jnp.float32))
    return pl.pallas_call(
        _conv_stage_kernel,
        out_shape=out_shape,
        grid=(1,),
        in_specs=[pl.BlockSpec((B, H, Lin), lambda i: (0, 0, 0)),
                  pl.BlockSpec((3, Lin), lambda i: (0, 0)),
                  pl.BlockSpec((3, Lin, Lout), lambda i: (0, 0, 0))],
        out_specs=(pl.BlockSpec((B, H, Lout), lambda i: (0, 0, 0)),
                   pl.BlockSpec((2, Lout), lambda i: (0, 0))),
        compiler_params=pltpu.CompilerParams(
            # single whole-batch step; stats are per-call (no resident
            # accumulator), so a future batch/row tiling can mark this 'parallel'.
            dimension_semantics=("arbitrary",),
            vmem_limit_bytes=_vmem_limit_bytes(act, bn_p, w_band, *out_shape)),
    )(act, bn_p, w_band)


# ---------------------------------------------------------------------------
# Kernel 2: fused [last-stage BN apply] -> separable bilinear x2 upsample
#           (align_corners=False): banded lane (W) matmul + tiny row (H) matmul.
# ---------------------------------------------------------------------------
def _bn_up2_kernel(x_ref, p_ref, uw_ref, uh_ref, o_ref):
    # x_ref:  (B*H, W*C)     bf16  last-stage post-ReLU activation (lane-dense)
    # p_ref:  (3, W*C)       f32   last-stage BN params, lane-tiled
    # uw_ref: (W*C, 2W*C)    f32   banded lane (W) bilinear-x2 matrix
    # uh_ref: (B*2H, B*H)    f32   block-diag(I_B (x) U_H) row (H) bilinear-x2 matrix
    # o_ref:  (B*2H, 2W*C)   f32   upsampled output (lane-dense)
    x = x_ref[...].astype(jnp.float32)
    xn = (x - p_ref[0, :]) * p_ref[1, :] + p_ref[2, :]
    t = jnp.dot(xn, uw_ref[...], preferred_element_type=jnp.float32)     # W pass
    o_ref[...] = jnp.dot(uh_ref[...], t, preferred_element_type=jnp.float32)  # H pass


def bn_bilinear_upsample2(act, bn_p, uw, uh):
    B, H, L = act.shape
    x2 = act.reshape(B * H, L)                     # free row-major fold
    out_shape = jax.ShapeDtypeStruct((uh.shape[0], uw.shape[1]), jnp.float32)
    return pl.pallas_call(
        _bn_up2_kernel,
        out_shape=out_shape,
        grid=(1,),
        in_specs=[pl.BlockSpec((B * H, L), lambda i: (0, 0)),
                  pl.BlockSpec((3, L), lambda i: (0, 0)),
                  pl.BlockSpec(tuple(uw.shape), lambda i: (0, 0)),
                  pl.BlockSpec(tuple(uh.shape), lambda i: (0, 0))],
        out_specs=pl.BlockSpec((uh.shape[0], uw.shape[1]), lambda i: (0, 0)),
        compiler_params=pltpu.CompilerParams(
            dimension_semantics=("arbitrary",),
            vmem_limit_bytes=_vmem_limit_bytes(x2, bn_p, uw, uh, out_shape)),
    )(x2, bn_p, uw, uh)


# ---------------------------------------------------------------------------
# Host-side constant / parameter construction
# ---------------------------------------------------------------------------
def _conv_band_weights(w, W):
    """Fold the 3 kx taps and the zero W-padding of a 3x3 SAME conv into three
    block-banded matrices: band[ky][(x+kx-1)*Cin+ci, x*Cout+co] = w[ky,kx,ci,co]
    for 0 <= x+kx-1 < W."""
    Cin, Cout = w.shape[2], w.shape[3]
    sel = np.zeros((3, W, W), np.float32)
    for kx in range(3):
        for x in range(W):
            p = x + kx - 1
            if 0 <= p < W:
                sel[kx, p, x] = 1.0
    band = jnp.einsum('kpx,ykio->ypixo', sel, w)          # (3, W, Cin, W, Cout)
    return band.reshape(3, W * Cin, W * Cout).astype(jnp.bfloat16)


def _up2_matrix(n):
    """(2n, n) 1-D bilinear x2 interpolation matrix, align_corners=False."""
    u = np.zeros((2 * n, n), np.float32)
    for i in range(n):
        u[2 * i, i] += 0.75
        u[2 * i, max(i - 1, 0)] += 0.25
        u[2 * i + 1, i] += 0.75
        u[2 * i + 1, min(i + 1, n - 1)] += 0.25
    return u


def _lane_up2_matrix(W, C):
    """(W*C, 2W*C) banded matrix: bilinear x2 along W in the lane-folded layout."""
    uw = _up2_matrix(W)                                   # (2W, W)
    m = np.einsum('rx,cd->xcrd', uw, np.eye(C, dtype=np.float32))
    return m.reshape(W * C, 2 * W * C)


def init_coupled_up_real_params(key, inp_channel, outp_channels):
    layers = []
    prev = inp_channel
    for c in outp_channels:
        key, kw = jax.random.split(key)
        w = jax.random.normal(kw, (3, 3, prev, c), jnp.float32) / np.sqrt(9.0 * prev)
        layers.append(dict(w=w,
                           gamma=jnp.ones((c,), jnp.float32),
                           beta=jnp.zeros((c,), jnp.float32)))
        prev = c
    return {'layers': layers}


# ---------------------------------------------------------------------------
# Forward (train_mode=True path)
# ---------------------------------------------------------------------------
def coupled_up_real_forward(x, params):
    """(Conv3x3 -> ReLU -> BatchNorm2d)* -> bilinear x2, x in NHWC."""
    B, H, W, C = x.shape
    n = float(B * H * W)

    act = x.reshape(B, H, W * C)                           # lane-dense fold (free)
    # identity BN params ahead of stage 0 (raw input feeds the first conv)
    mean = jnp.zeros((C,), jnp.float32)
    scale = jnp.ones((C,), jnp.float32)
    beta = jnp.zeros((C,), jnp.float32)

    for lp in params['layers']:
        Cout = lp['w'].shape[3]
        bn_p = jnp.stack([jnp.tile(mean, W), jnp.tile(scale, W),
                          jnp.tile(beta, W)], axis=0)      # (3, W*Cin)
        w_band = _conv_band_weights(lp['w'], W)
        act, stats = conv_stage(act, bn_p, w_band)
        sc = stats.reshape(2, W, Cout).sum(axis=1)         # fold W -> per-channel
        mean = sc[0] / n
        var = jnp.maximum(sc[1] / n - mean * mean, 0.0)    # biased var, clamped
        scale = lp['gamma'] * jax.lax.rsqrt(var + EPS_BN)
        beta = lp['beta']
        C = Cout

    bn_p = jnp.stack([jnp.tile(mean, W), jnp.tile(scale, W),
                      jnp.tile(beta, W)], axis=0)          # (3, W*C)
    uw = jnp.asarray(_lane_up2_matrix(W, C))               # (W*C, 2W*C)
    uh = jnp.asarray(np.kron(np.eye(B, dtype=np.float32), _up2_matrix(H)))  # (B*2H, B*H)
    out = bn_bilinear_upsample2(act, bn_p, uw, uh)         # (B*2H, 2W*C)
    return out.reshape(B, 2 * H, 2 * W, C)                 # free row-major reshape


# ---------------------------------------------------------------------------
# Pure-JAX reference (mirrors the kernels' precision choices: bf16 conv
# operands / inter-stage activations, f32 accumulation and BN math).
# ---------------------------------------------------------------------------
def _reference_forward(x, params):
    C = x.shape[-1]
    mean = jnp.zeros((C,), jnp.float32)
    scale = jnp.ones((C,), jnp.float32)
    beta = jnp.zeros((C,), jnp.float32)
    act = x
    for lp in params['layers']:
        xn = (act.astype(jnp.float32) - mean) * scale + beta
        y = jax.lax.conv_general_dilated(
            xn.astype(jnp.bfloat16), lp['w'].astype(jnp.bfloat16),
            window_strides=(1, 1), padding='SAME',
            dimension_numbers=('NHWC', 'HWIO', 'NHWC'),
            preferred_element_type=jnp.float32)
        y = jnp.maximum(y, 0.0)
        m = jnp.mean(y, axis=(0, 1, 2))
        var = jnp.maximum(jnp.mean(y * y, axis=(0, 1, 2)) - m * m, 0.0)
        mean, scale, beta = m, lp['gamma'] * jax.lax.rsqrt(var + EPS_BN), lp['beta']
        act = y.astype(jnp.bfloat16)
    xn = (act.astype(jnp.float32) - mean) * scale + beta

    def up2(a, axis):   # bilinear x2 along `axis`, align_corners=False
        m_ = a.shape[axis]
        first = jax.lax.slice_in_dim(a, 0, 1, axis=axis)
        last = jax.lax.slice_in_dim(a, m_ - 1, m_, axis=axis)
        prev = jnp.concatenate([first, jax.lax.slice_in_dim(a, 0, m_ - 1, axis=axis)], axis=axis)
        nxt = jnp.concatenate([jax.lax.slice_in_dim(a, 1, m_, axis=axis), last], axis=axis)
        even = 0.75 * a + 0.25 * prev
        odd = 0.75 * a + 0.25 * nxt
        out = jnp.stack([even, odd], axis=axis + 1)
        shape = list(a.shape)
        shape[axis] = 2 * m_
        return out.reshape(shape)

    return up2(up2(xn, 1), 2)


if __name__ == "__main__":
    key = jax.random.PRNGKey(0)
    k_x, k_p = jax.random.split(key)
    B, Cin, H, W = 2, 4, 16, 16
    outp_channels = [8, 8]

    x = jax.random.normal(k_x, (B, H, W, Cin), jnp.float32)       # NHWC
    params = init_coupled_up_real_params(k_p, Cin, outp_channels)

    fwd = jax.jit(coupled_up_real_forward)
    out = jax.block_until_ready(fwd(x, params))

    ref = _reference_forward(x, params)
    np.testing.assert_allclose(np.asarray(out), np.asarray(ref),
                               atol=2e-2, rtol=2e-2)

    assert out.shape == (B, 2 * H, 2 * W, outp_channels[-1])
    print("KERNEL_OK")
</pallas_src>

<mosaic_0001>
module attributes {stable_mosaic.version = 11 : i64} {
  func.func @_conv_stage_kernel(%arg0: i32, %arg1: memref<2x16x64xf32, #tpu.memory_space<vmem>>, %arg2: memref<3x64xf32, #tpu.memory_space<vmem>>, %arg3: memref<3x64x128xbf16, #tpu.memory_space<vmem>>, %arg4: memref<2x16x128xbf16, #tpu.memory_space<vmem>>, %arg5: memref<2x128xf32, #tpu.memory_space<vmem>>) attributes {dimension_semantics = [#tpu.dimension_semantics<arbitrary>], iteration_bounds = array<i64: 1>, scalar_prefetch = 0 : i64, scratch_operands = 0 : i64, tpu.core_type = #tpu.core_type<tc>, window_params = [{pipeline_mode = #tpu.pipeline_mode<synchronous>, transform_indices = @transform_0, window_bounds = array<i64: 2, 16, 64>}, {pipeline_mode = #tpu.pipeline_mode<synchronous>, transform_indices = @transform_1, window_bounds = array<i64: 3, 64>}, {pipeline_mode = #tpu.pipeline_mode<synchronous>, transform_indices = @transform_2, window_bounds = array<i64: 3, 64, 128>}, {pipeline_mode = #tpu.pipeline_mode<synchronous>, transform_indices = @transform_3, window_bounds = array<i64: 2, 16, 128>}, {pipeline_mode = #tpu.pipeline_mode<synchronous>, transform_indices = @transform_4, window_bounds = array<i64: 2, 128>}]} {
    %c0 = arith.constant 0 : index
    %c0_0 = arith.constant 0 : index
    %c0_1 = arith.constant 0 : index
    %0 = vector.load %arg1[%c0, %c0_0, %c0_1] : memref<2x16x64xf32, #tpu.memory_space<vmem>>, vector<2x16x64xf32>
    %c0_2 = arith.constant 0 : index
    %c0_3 = arith.constant 0 : index
    %1 = vector.load %arg2[%c0_2, %c0_3] : memref<3x64xf32, #tpu.memory_space<vmem>>, vector<1x64xf32>
    %2 = vector.shape_cast %1 : vector<1x64xf32> to vector<64xf32>
    %3 = vector.shape_cast %2 : vector<64xf32> to vector<1x1x64xf32>
    %4 = vector.broadcast %3 : vector<1x1x64xf32> to vector<2x16x64xf32>
    %5 = arith.subf %0, %4 : vector<2x16x64xf32>
    %c1 = arith.constant 1 : index
    %c0_4 = arith.constant 0 : index
    %6 = vector.load %arg2[%c1, %c0_4] : memref<3x64xf32, #tpu.memory_space<vmem>>, vector<1x64xf32>
    %7 = vector.shape_cast %6 : vector<1x64xf32> to vector<64xf32>
    %8 = vector.shape_cast %7 : vector<64xf32> to vector<1x1x64xf32>
    %9 = vector.broadcast %8 : vector<1x1x64xf32> to vector<2x16x64xf32>
    %10 = arith.mulf %5, %9 : vector<2x16x64xf32>
    %c2 = arith.constant 2 : index
    %c0_5 = arith.constant 0 : index
    %11 = vector.load %arg2[%c2, %c0_5] : memref<3x64xf32, #tpu.memory_space<vmem>>, vector<1x64xf32>
    %12 = vector.shape_cast %11 : vector<1x64xf32> to vector<64xf32>
    %13 = vector.shape_cast %12 : vector<64xf32> to vector<1x1x64xf32>
    %14 = vector.broadcast %13 : vector<1x1x64xf32> to vector<2x16x64xf32>
    %15 = arith.addf %10, %14 : vector<2x16x64xf32>
    %cst = arith.constant 0.000000e+00 : f32
    %16 = vector.broadcast %cst : f32 to vector<2x1x64xf32>
    %17 = tpu.concatenate %16, %15, %16 in 1 : vector<2x1x64xf32>, vector<2x16x64xf32>, vector<2x1x64xf32> -> vector<2x18x64xf32>
    %18 = vector.extract_strided_slice %17 {offsets = [0, 0, 0], sizes = [2, 16, 64], strides = [1, 1, 1]} : vector<2x18x64xf32> to vector<2x16x64xf32>
    %19 = vector.shape_cast %18 : vector<2x16x64xf32> to vector<32x64xf32>
    %20 = arith.truncf %19 : vector<32x64xf32> to vector<32x64xbf16>
    %c0_6 = arith.constant 0 : index
    %c0_7 = arith.constant 0 : index
    %c0_8 = arith.constant 0 : index
    %21 = vector.load %arg3[%c0_6, %c0_7, %c0_8] : memref<3x64x128xbf16, #tpu.memory_space<vmem>>, vector<1x64x128xbf16>
    %22 = vector.shape_cast %21 : vector<1x64x128xbf16> to vector<64x128xbf16>
    %cst_9 = arith.constant dense<0.000000e+00> : vector<32x128xf32>
    %23 = tpu.matmul %20, %22, %cst_9 {dimension_numbers = #tpu.dot_dimension_numbers<[1], [0], [0], [1], [0, 0, 1, 1], [], []>} : vector<32x64xbf16>, vector<64x128xbf16>, vector<32x128xf32> -> vector<32x128xf32>
    %24 = vector.extract_strided_slice %17 {offsets = [0, 1, 0], sizes = [2, 16, 64], strides = [1, 1, 1]} : vector<2x18x64xf32> to vector<2x16x64xf32>
    %25 = vector.shape_cast %24 : vector<2x16x64xf32> to vector<32x64xf32>
    %26 = arith.truncf %25 : vector<32x64xf32> to vector<32x64xbf16>
    %c1_10 = arith.constant 1 : index
    %c0_11 = arith.constant 0 : index
    %c0_12 = arith.constant 0 : index
    %27 = vector.load %arg3[%c1_10, %c0_11, %c0_12] : memref<3x64x128xbf16, #tpu.memory_space<vmem>>, vector<1x64x128xbf16>
    %28 = vector.shape_cast %27 : vector<1x64x128xbf16> to vector<64x128xbf16>
    %cst_13 = arith.constant dense<0.000000e+00> : vector<32x128xf32>
    %29 = tpu.matmul %26, %28, %cst_13 {dimension_numbers = #tpu.dot_dimension_numbers<[1], [0], [0], [1], [0, 0, 1, 1], [], []>} : vector<32x64xbf16>, vector<64x128xbf16>, vector<32x128xf32> -> vector<32x128xf32>
    %30 = arith.addf %23, %29 : vector<32x128xf32>
    %31 = vector.extract_strided_slice %17 {offsets = [0, 2, 0], sizes = [2, 16, 64], strides = [1, 1, 1]} : vector<2x18x64xf32> to vector<2x16x64xf32>
    %32 = vector.shape_cast %31 : vector<2x16x64xf32> to vector<32x64xf32>
    %33 = arith.truncf %32 : vector<32x64xf32> to vector<32x64xbf16>
    %c2_14 = arith.constant 2 : index
    %c0_15 = arith.constant 0 : index
    %c0_16 = arith.constant 0 : index
    %34 = vector.load %arg3[%c2_14, %c0_15, %c0_16] : memref<3x64x128xbf16, #tpu.memory_space<vmem>>, vector<1x64x128xbf16>
    %35 = vector.shape_cast %34 : vector<1x64x128xbf16> to vector<64x128xbf16>
    %cst_17 = arith.constant dense<0.000000e+00> : vector<32x128xf32>
    %36 = tpu.matmul %33, %35, %cst_17 {dimension_numbers = #tpu.dot_dimension_numbers<[1], [0], [0], [1], [0, 0, 1, 1], [], []>} : vector<32x64xbf16>, vector<64x128xbf16>, vector<32x128xf32> -> vector<32x128xf32>
    %37 = arith.addf %30, %36 : vector<32x128xf32>
    %cst_18 = arith.constant 0.000000e+00 : f32
    %38 = vector.broadcast %cst_18 : f32 to vector<32x128xf32>
    %39 = arith.maximumf %37, %38 : vector<32x128xf32>
    %40 = vector.shape_cast %39 : vector<32x128xf32> to vector<2x16x128xf32>
    %41 = arith.truncf %40 : vector<2x16x128xf32> to vector<2x16x128xbf16>
    %c0_19 = arith.constant 0 : index
    %c0_20 = arith.constant 0 : index
    %c0_21 = arith.constant 0 : index
    %42 = vector.load %arg4[%c0_19, %c0_20, %c0_21] : memref<2x16x128xbf16, #tpu.memory_space<vmem>>, vector<2x16x128xbf16>
    tpu.vector_store %arg4[%c0_19, %c0_20, %c0_21], %41 {strides = array<i32>} : memref<2x16x128xbf16, #tpu.memory_space<vmem>>, vector<2x16x128xbf16>,
    %cst_22 = arith.constant dense<0.000000e+00> : vector<128xf32>
    %43 = vector.multi_reduction <add>, %39, %cst_22 [0] : vector<32x128xf32> to vector<128xf32>
    %44 = vector.shape_cast %43 : vector<128xf32> to vector<1x128xf32>
    %45 = arith.mulf %39, %39 : vector<32x128xf32>
    %cst_23 = arith.constant dense<0.000000e+00> : vector<128xf32>
    %46 = vector.multi_reduction <add>, %45, %cst_23 [0] : vector<32x128xf32> to vector<128xf32>
    %47 = vector.shape_cast %46 : vector<128xf32> to vector<1x128xf32>
    %48 = tpu.concatenate %44, %47 in 0 : vector<1x128xf32>, vector<1x128xf32> -> vector<2x128xf32>
    %c0_24 = arith.constant 0 : index
    %c0_25 = arith.constant 0 : index
    %49 = vector.load %arg5[%c0_24, %c0_25] : memref<2x128xf32, #tpu.memory_space<vmem>>, vector<2x128xf32>
    tpu.vector_store %arg5[%c0_24, %c0_25], %48 {strides = array<i32>} : memref<2x128xf32, #tpu.memory_space<vmem>>, vector<2x128xf32>,
    return
  }
  func.func @transform_0(%arg0: i32) -> (i32, i32, i32) {
    %c0_i32 = arith.constant 0 : i32
    %c0_i32_0 = arith.constant 0 : i32
    %c0_i32_1 = arith.constant 0 : i32
    %c0_i32_2 = arith.constant 0 : i32
    return %c0_i32, %c0_i32_0, %c0_i32_1 : i32, i32, i32
  }
  func.func @transform_1(%arg0: i32) -> (i32, i32) {
    %c0_i32 = arith.constant 0 : i32
    %c0_i32_0 = arith.constant 0 : i32
    %c0_i32_1 = arith.constant 0 : i32
    return %c0_i32, %c0_i32_0 : i32, i32
  }
  func.func @transform_2(%arg0: i32) -> (i32, i32, i32) {
    %c0_i32 = arith.constant 0 : i32
    %c0_i32_0 = arith.constant 0 : i32
    %c0_i32_1 = arith.constant 0 : i32
    %c0_i32_2 = arith.constant 0 : i32
    return %c0_i32, %c0_i32_0, %c0_i32_1 : i32, i32, i32
  }
  func.func @transform_3(%arg0: i32) -> (i32, i32, i32) {
    %c0_i32 = arith.constant 0 : i32
    %c0_i32_0 = arith.constant 0 : i32
    %c0_i32_1 = arith.constant 0 : i32
    %c0_i32_2 = arith.constant 0 : i32
    return %c0_i32, %c0_i32_0, %c0_i32_1 : i32, i32, i32
  }
  func.func @transform_4(%arg0: i32) -> (i32, i32) {
    %c0_i32 = arith.constant 0 : i32
    %c0_i32_0 = arith.constant 0 : i32
    %c0_i32_1 = arith.constant 0 : i32
    return %c0_i32, %c0_i32_0 : i32, i32
  }
}

module attributes {stable_mosaic.version = 11 : i64} {
  func.func @_conv_stage_kernel(%arg0: i32, %arg1: memref<2x16x128xbf16, #tpu.memory_space<vmem>>, %arg2: memref<3x128xf32, #tpu.memory_space<vmem>>, %arg3: memref<3x128x128xbf16, #tpu.memory_space<vmem>>, %arg4: memref<2x16x128xbf16, #tpu.memory_space<vmem>>, %arg5: memref<2x128xf32, #tpu.memory_space<vmem>>) attributes {dimension_semantics = [#tpu.dimension_semantics<arbitrary>], iteration_bounds = array<i64: 1>, scalar_prefetch = 0 : i64, scratch_operands = 0 : i64, tpu.core_type = #tpu.core_type<tc>, window_params = [{pipeline_mode = #tpu.pipeline_mode<synchronous>, transform_indices = @transform_0, window_bounds = array<i64: 2, 16, 128>}, {pipeline_mode = #tpu.pipeline_mode<synchronous>, transform_indices = @transform_1, window_bounds = array<i64: 3, 128>}, {pipeline_mode = #tpu.pipeline_mode<synchronous>, transform_indices = @transform_2, window_bounds = array<i64: 3, 128, 128>}, {pipeline_mode = #tpu.pipeline_mode<synchronous>, transform_indices = @transform_3, window_bounds = array<i64: 2, 16, 128>}, {pipeline_mode = #tpu.pipeline_mode<synchronous>, transform_indices = @transform_4, window_bounds = array<i64: 2, 128>}]} {
    %c0 = arith.constant 0 : index
    %c0_0 = arith.constant 0 : index
    %c0_1 = arith.constant 0 : index
    %0 = vector.load %arg1[%c0, %c0_0, %c0_1] : memref<2x16x128xbf16, #tpu.memory_space<vmem>>, vector<2x16x128xbf16>
    %1 = arith.extf %0 : vector<2x16x128xbf16> to vector<2x16x128xf32>
    %c0_2 = arith.constant 0 : index
    %c0_3 = arith.constant 0 : index
    %2 = vector.load %arg2[%c0_2, %c0_3] : memref<3x128xf32, #tpu.memory_space<vmem>>, vector<1x128xf32>
    %3 = vector.shape_cast %2 : vector<1x128xf32> to vector<128xf32>
    %4 = vector.shape_cast %3 : vector<128xf32> to vector<1x1x128xf32>
    %5 = vector.broadcast %4 : vector<1x1x128xf32> to vector<2x16x128xf32>
    %6 = arith.subf %1, %5 : vector<2x16x128xf32>
    %c1 = arith.constant 1 : index
    %c0_4 = arith.constant 0 : index
    %7 = vector.load %arg2[%c1, %c0_4] : memref<3x128xf32, #tpu.memory_space<vmem>>, vector<1x128xf32>
    %8 = vector.shape_cast %7 : vector<1x128xf32> to vector<128xf32>
    %9 = vector.shape_cast %8 : vector<128xf32> to vector<1x1x128xf32>
    %10 = vector.broadcast %9 : vector<1x1x128xf32> to vector<2x16x128xf32>
    %11 = arith.mulf %6, %10 : vector<2x16x128xf32>
    %c2 = arith.constant 2 : index
    %c0_5 = arith.constant 0 : index
    %12 = vector.load %arg2[%c2, %c0_5] : memref<3x128xf32, #tpu.memory_space<vmem>>, vector<1x128xf32>
    %13 = vector.shape_cast %12 : vector<1x128xf32> to vector<128xf32>
    %14 = vector.shape_cast %13 : vector<128xf32> to vector<1x1x128xf32>
    %15 = vector.broadcast %14 : vector<1x1x128xf32> to vector<2x16x128xf32>
    %16 = arith.addf %11, %15 : vector<2x16x128xf32>
    %cst = arith.constant 0.000000e+00 : f32
    %17 = vector.broadcast %cst : f32 to vector<2x1x128xf32>
    %18 = tpu.concatenate %17, %16, %17 in 1 : vector<2x1x128xf32>, vector<2x16x128xf32>, vector<2x1x128xf32> -> vector<2x18x128xf32>
    %19 = vector.extract_strided_slice %18 {offsets = [0, 0, 0], sizes = [2, 16, 128], strides = [1, 1, 1]} : vector<2x18x128xf32> to vector<2x16x128xf32>
    %20 = vector.shape_cast %19 : vector<2x16x128xf32> to vector<32x128xf32>
    %21 = arith.truncf %20 : vector<32x128xf32> to vector<32x128xbf16>
    %c0_6 = arith.constant 0 : index
    %c0_7 = arith.constant 0 : index
    %c0_8 = arith.constant 0 : index
    %22 = vector.load %arg3[%c0_6, %c0_7, %c0_8] : memref<3x128x128xbf16, #tpu.memory_space<vmem>>, vector<1x128x128xbf16>
    %23 = vector.shape_cast %22 : vector<1x128x128xbf16> to vector<128x128xbf16>
    %cst_9 = arith.constant dense<0.000000e+00> : vector<32x128xf32>
    %24 = tpu.matmul %21, %23, %cst_9 {dimension_numbers = #tpu.dot_dimension_numbers<[1], [0], [0], [1], [0, 0, 1, 1], [], []>} : vector<32x128xbf16>, vector<128x128xbf16>, vector<32x128xf32> -> vector<32x128xf32>
    %25 = vector.extract_strided_slice %18 {offsets = [0, 1, 0], sizes = [2, 16, 128], strides = [1, 1, 1]} : vector<2x18x128xf32> to vector<2x16x128xf32>
    %26 = vector.shape_cast %25 : vector<2x16x128xf32> to vector<32x128xf32>
    %27 = arith.truncf %26 : vector<32x128xf32> to vector<32x128xbf16>
    %c1_10 = arith.constant 1 : index
    %c0_11 = arith.constant 0 : index
    %c0_12 = arith.constant 0 : index
    %28 = vector.load %arg3[%c1_10, %c0_11, %c0_12] : memref<3x128x128xbf16, #tpu.memory_space<vmem>>, vector<1x128x128xbf16>
    %29 = vector.shape_cast %28 : vector<1x128x128xbf16> to vector<128x128xbf16>
    %cst_13 = arith.constant dense<0.000000e+00> : vector<32x128xf32>
    %30 = tpu.matmul %27, %29, %cst_13 {dimension_numbers = #tpu.dot_dimension_numbers<[1], [0], [0], [1], [0, 0, 1, 1], [], []>} : vector<32x128xbf16>, vector<128x128xbf16>, vector<32x128xf32> -> vector<32x128xf32>
    %31 = arith.addf %24, %30 : vector<32x128xf32>
    %32 = vector.extract_strided_slice %18 {offsets = [0, 2, 0], sizes = [2, 16, 128], strides = [1, 1, 1]} : vector<2x18x128xf32> to vector<2x16x128xf32>
    %33 = vector.shape_cast %32 : vector<2x16x128xf32> to vector<32x128xf32>
    %34 = arith.truncf %33 : vector<32x128xf32> to vector<32x128xbf16>
    %c2_14 = arith.constant 2 : index
    %c0_15 = arith.constant 0 : index
    %c0_16 = arith.constant 0 : index
    %35 = vector.load %arg3[%c2_14, %c0_15, %c0_16] : memref<3x128x128xbf16, #tpu.memory_space<vmem>>, vector<1x128x128xbf16>
    %36 = vector.shape_cast %35 : vector<1x128x128xbf16> to vector<128x128xbf16>
    %cst_17 = arith.constant dense<0.000000e+00> : vector<32x128xf32>
    %37 = tpu.matmul %34, %36, %cst_17 {dimension_numbers = #tpu.dot_dimension_numbers<[1], [0], [0], [1], [0, 0, 1, 1], [], []>} : vector<32x128xbf16>, vector<128x128xbf16>, vector<32x128xf32> -> vector<32x128xf32>
    %38 = arith.addf %31, %37 : vector<32x128xf32>
    %cst_18 = arith.constant 0.000000e+00 : f32
    %39 = vector.broadcast %cst_18 : f32 to vector<32x128xf32>
    %40 = arith.maximumf %38, %39 : vector<32x128xf32>
    %41 = vector.shape_cast %40 : vector<32x128xf32> to vector<2x16x128xf32>
    %42 = arith.truncf %41 : vector<2x16x128xf32> to vector<2x16x128xbf16>
    %c0_19 = arith.constant 0 : index
    %c0_20 = arith.constant 0 : index
    %c0_21 = arith.constant 0 : index
    %43 = vector.load %arg4[%c0_19, %c0_20, %c0_21] : memref<2x16x128xbf16, #tpu.memory_space<vmem>>, vector<2x16x128xbf16>
    tpu.vector_store %arg4[%c0_19, %c0_20, %c0_21], %42 {strides = array<i32>} : memref<2x16x128xbf16, #tpu.memory_space<vmem>>, vector<2x16x128xbf16>,
    %cst_22 = arith.constant dense<0.000000e+00> : vector<128xf32>
    %44 = vector.multi_reduction <add>, %40, %cst_22 [0] : vector<32x128xf32> to vector<128xf32>
    %45 = vector.shape_cast %44 : vector<128xf32> to vector<1x128xf32>
    %46 = arith.mulf %40, %40 : vector<32x128xf32>
    %cst_23 = arith.constant dense<0.000000e+00> : vector<128xf32>
    %47 = vector.multi_reduction <add>, %46, %cst_23 [0] : vector<32x128xf32> to vector<128xf32>
    %48 = vector.shape_cast %47 : vector<128xf32> to vector<1x128xf32>
    %49 = tpu.concatenate %45, %48 in 0 : vector<1x128xf32>, vector<1x128xf32> -> vector<2x128xf32>
    %c0_24 = arith.constant 0 : index
    %c0_25 = arith.constant 0 : index
    %50 = vector.load %arg5[%c0_24, %c0_25] : memref<2x128xf32, #tpu.memory_space<vmem>>, vector<2x128xf32>
    tpu.vector_store %arg5[%c0_24, %c0_25], %49 {strides = array<i32>} : memref<2x128xf32, #tpu.memory_space<vmem>>, vector<2x128xf32>,
    return
  }
  func.func @transform_0(%arg0: i32) -> (i32, i32, i32) {
    %c0_i32 = arith.constant 0 : i32
    %c0_i32_0 = arith.constant 0 : i32
    %c0_i32_1 = arith.constant 0 : i32
    %c0_i32_2 = arith.constant 0 : i32
    return %c0_i32, %c0_i32_0, %c0_i32_1 : i32, i32, i32
  }
  func.func @transform_1(%arg0: i32) -> (i32, i32) {
    %c0_i32 = arith.constant 0 : i32
    %c0_i32_0 = arith.constant 0 : i32
    %c0_i32_1 = arith.constant 0 : i32
    return %c0_i32, %c0_i32_0 : i32, i32
  }
  func.func @transform_2(%arg0: i32) -> (i32, i32, i32) {
    %c0_i32 = arith.constant 0 : i32
    %c0_i32_0 = arith.constant 0 : i32
    %c0_i32_1 = arith.constant 0 : i32
    %c0_i32_2 = arith.constant 0 : i32
    return %c0_i32, %c0_i32_0, %c0_i32_1 : i32, i32, i32
  }
  func.func @transform_3(%arg0: i32) -> (i32, i32, i32) {
    %c0_i32 = arith.constant 0 : i32
    %c0_i32_0 = arith.constant 0 : i32
    %c0_i32_1 = arith.constant 0 : i32
    %c0_i32_2 = arith.constant 0 : i32
    return %c0_i32, %c0_i32_0, %c0_i32_1 : i32, i32, i32
  }
  func.func @transform_4(%arg0: i32) -> (i32, i32) {
    %c0_i32 = arith.constant 0 : i32
    %c0_i32_0 = arith.constant 0 : i32
    %c0_i32_1 = arith.constant 0 : i32
    return %c0_i32, %c0_i32_0 : i32, i32
  }
}

module attributes {stable_mosaic.version = 11 : i64} {
  func.func @_bn_up2_kernel(%arg0: i32, %arg1: memref<32x128xbf16, #tpu.memory_space<vmem>>, %arg2: memref<3x128xf32, #tpu.memory_space<vmem>>, %arg3: memref<128x256xf32, #tpu.memory_space<vmem>>, %arg4: memref<64x32xf32, #tpu.memory_space<vmem>>, %arg5: memref<64x256xf32, #tpu.memory_space<vmem>>) attributes {dimension_semantics = [#tpu.dimension_semantics<arbitrary>], iteration_bounds = array<i64: 1>, scalar_prefetch = 0 : i64, scratch_operands = 0 : i64, tpu.core_type = #tpu.core_type<tc>, window_params = [{pipeline_mode = #tpu.pipeline_mode<synchronous>, transform_indices = @transform_0, window_bounds = array<i64: 32, 128>}, {pipeline_mode = #tpu.pipeline_mode<synchronous>, transform_indices = @transform_1, window_bounds = array<i64: 3, 128>}, {pipeline_mode = #tpu.pipeline_mode<synchronous>, transform_indices = @transform_2, window_bounds = array<i64: 128, 256>}, {pipeline_mode = #tpu.pipeline_mode<synchronous>, transform_indices = @transform_3, window_bounds = array<i64: 64, 32>}, {pipeline_mode = #tpu.pipeline_mode<synchronous>, transform_indices = @transform_4, window_bounds = array<i64: 64, 256>}]} {
    %c0 = arith.constant 0 : index
    %c0_0 = arith.constant 0 : index
    %0 = vector.load %arg1[%c0, %c0_0] : memref<32x128xbf16, #tpu.memory_space<vmem>>, vector<32x128xbf16>
    %1 = arith.extf %0 : vector<32x128xbf16> to vector<32x128xf32>
    %c0_1 = arith.constant 0 : index
    %c0_2 = arith.constant 0 : index
    %2 = vector.load %arg2[%c0_1, %c0_2] : memref<3x128xf32, #tpu.memory_space<vmem>>, vector<1x128xf32>
    %3 = vector.shape_cast %2 : vector<1x128xf32> to vector<128xf32>
    %4 = vector.shape_cast %3 : vector<128xf32> to vector<1x128xf32>
    %5 = vector.broadcast %4 : vector<1x128xf32> to vector<32x128xf32>
    %6 = arith.subf %1, %5 : vector<32x128xf32>
    %c1 = arith.constant 1 : index
    %c0_3 = arith.constant 0 : index
    %7 = vector.load %arg2[%c1, %c0_3] : memref<3x128xf32, #tpu.memory_space<vmem>>, vector<1x128xf32>
    %8 = vector.shape_cast %7 : vector<1x128xf32> to vector<128xf32>
    %9 = vector.shape_cast %8 : vector<128xf32> to vector<1x128xf32>
    %10 = vector.broadcast %9 : vector<1x128xf32> to vector<32x128xf32>
    %11 = arith.mulf %6, %10 : vector<32x128xf32>
    %c2 = arith.constant 2 : index
    %c0_4 = arith.constant 0 : index
    %12 = vector.load %arg2[%c2, %c0_4] : memref<3x128xf32, #tpu.memory_space<vmem>>, vector<1x128xf32>
    %13 = vector.shape_cast %12 : vector<1x128xf32> to vector<128xf32>
    %14 = vector.shape_cast %13 : vector<128xf32> to vector<1x128xf32>
    %15 = vector.broadcast %14 : vector<1x128xf32> to vector<32x128xf32>
    %16 = arith.addf %11, %15 : vector<32x128xf32>
    %c0_5 = arith.constant 0 : index
    %c0_6 = arith.constant 0 : index
    %17 = vector.load %arg3[%c0_5, %c0_6] : memref<128x256xf32, #tpu.memory_space<vmem>>, vector<128x256xf32>
    %cst = arith.constant dense<0.000000e+00> : vector<32x256xf32>
    %18 = tpu.matmul %16, %17, %cst {dimension_numbers = #tpu.dot_dimension_numbers<[1], [0], [0], [1], [0, 0, 1, 1], [], []>} : vector<32x128xf32>, vector<128x256xf32>, vector<32x256xf32> -> vector<32x256xf32>
    %c0_7 = arith.constant 0 : index
    %c0_8 = arith.constant 0 : index
    %19 = vector.load %arg4[%c0_7, %c0_8] : memref<64x32xf32, #tpu.memory_space<vmem>>, vector<64x32xf32>
    %cst_9 = arith.constant dense<0.000000e+00> : vector<64x256xf32>
    %20 = tpu.matmul %19, %18, %cst_9 {dimension_numbers = #tpu.dot_dimension_numbers<[1], [0], [0], [1], [0, 0, 1, 1], [], []>} : vector<64x32xf32>, vector<32x256xf32>, vector<64x256xf32> -> vector<64x256xf32>
    %c0_10 = arith.constant 0 : index
    %c0_11 = arith.constant 0 : index
    %21 = vector.load %arg5[%c0_10, %c0_11] : memref<64x256xf32, #tpu.memory_space<vmem>>, vector<64x256xf32>
    tpu.vector_store %arg5[%c0_10, %c0_11], %20 {strides = array<i32>} : memref<64x256xf32, #tpu.memory_space<vmem>>, vector<64x256xf32>,
    return
  }
  func.func @transform_0(%arg0: i32) -> (i32, i32) {
    %c0_i32 = arith.constant 0 : i32
    %c0_i32_0 = arith.constant 0 : i32
    %c0_i32_1 = arith.constant 0 : i32
    return %c0_i32, %c0_i32_0 : i32, i32
  }
  func.func @transform_1(%arg0: i32) -> (i32, i32) {
    %c0_i32 = arith.constant 0 : i32
    %c0_i32_0 = arith.constant 0 : i32
    %c0_i32_1 = arith.constant 0 : i32
    return %c0_i32, %c0_i32_0 : i32, i32
  }
  func.func @transform_2(%arg0: i32) -> (i32, i32) {
    %c0_i32 = arith.constant 0 : i32
    %c0_i32_0 = arith.constant 0 : i32
    %c0_i32_1 = arith.constant 0 : i32
    return %c0_i32, %c0_i32_0 : i32, i32
  }
  func.func @transform_3(%arg0: i32) -> (i32, i32) {
    %c0_i32 = arith.constant 0 : i32
    %c0_i32_0 = arith.constant 0 : i32
    %c0_i32_1 = arith.constant 0 : i32
    return %c0_i32, %c0_i32_0 : i32, i32
  }
  func.func @transform_4(%arg0: i32) -> (i32, i32) {
    %c0_i32 = arith.constant 0 : i32
    %c0_i32_0 = arith.constant 0 : i32
    %c0_i32_1 = arith.constant 0 : i32
    return %c0_i32, %c0_i32_0 : i32, i32
  }
}

</mosaic_0001>

<llo_original>
// kernel: tile.33
$region0: #{tile.33}
  #allocation0 [shape = 's32[1]{0}', space=sflag, size = 0x4, scoped, tag = 'scoped memory for tile.33']
  %s0 = inlined_call_operand.vmem [shape: f32[8], index: 0, kind: input, shape index: {}]
  %s1 = inlined_call_operand.vmem [shape: f32[16,8], index: 1, kind: output, shape index: {}]
  // Predicated region
  $region2: #{tile.33} parent=0 // pred_check
    _
  $region3: #{tile.33} parent=0 // pred_check_branch
    %3 = sbr.rel (0) target = $region5
  $region4: #{tile.33} parent=0 // pred_region
    _
  $region5: #{tile.33} parent=0 // pred_fallthru
    _
  %v4 = vld [vmem:[%s0] ss:$0 sm:$0xff]
  %5 = vst [vmem:[%s1] sm:$0xff] %v4
  %s6 = scalar_lea.vmem %s1, 8
  %7 = vst [vmem:[%s6] sm:$0xff] %v4

// kernel: tile.42
$region0: #{tile.42}
  %s0 = inlined_call_operand.vmem [shape: f32[16,8], index: 0, kind: input, shape index: {}]
  %s1 = inlined_call_operand.vmem [shape: f32[1,128], index: 1, kind: output, shape index: {}]
  $region1: #{tile.42} parent=0
    #allocation0 [shape = 'u8[4096]{0}', space=vmem, size = 0x1000, scoped, tag = 'scoped mem for output reshape']
    %v2 = vld [vmem:[%s0] sm:$0x1]
    %vm3 = vcmask 64512
    %4 = vst.msk [vmem:[#allocation0] sm:$0x1] %vm3, %v2
    %s5 = scalar_lea.vmem %s0, 15
    %v6 = vld [vmem:[%s5] sm:$0x1]
    %7 = vrot.lane.b32.xlu0 %v6, 120
    %v8 = vpop.permute.xlu0 %7
    %vm9 = vcmask 1048512
    %10 = vst.msk [vmem:[#allocation0] sm:$0x1] %vm9, %v8
    %s11 = scalar_lea.vmem %s0, 14
    %v12 = vld [vmem:[%s11] sm:$0x1]
    %13 = vrot.lane.b32.xlu0 %v12, 112
    %v14 = vpop.permute.xlu0 %13
    %vm15 = vcmask 982912
    %16 = vst.msk [vmem:[#allocation0] sm:$0x1] %vm15, %v14
    %s17 = scalar_lea.vmem %s0, 13
    %v18 = vld [vmem:[%s17] sm:$0x1]
    %19 = vrot.lane.b32.xlu0 %v18, 104
    %v20 = vpop.permute.xlu0 %19
    %vm21 = vcmask 917312
    %22 = vst.msk [vmem:[#allocation0] sm:$0x1] %vm21, %v20
    %s23 = scalar_lea.vmem %s0, 12
    %v24 = vld [vmem:[%s23] sm:$0x1]
    %25 = vrot.lane.b32.xlu0 %v24, 96
    %v26 = vpop.permute.xlu0 %25
    %vm27 = vcmask 851712
    %28 = vst.msk [vmem:[#allocation0] sm:$0x1] %vm27, %v26
    %s29 = scalar_lea.vmem %s0, 11
    %v30 = vld [vmem:[%s29] sm:$0x1]
    %31 = vrot.lane.b32.xlu0 %v30, 88
    %v32 = vpop.permute.xlu0 %31
    %vm33 = vcmask 786112
    %34 = vst.msk [vmem:[#allocation0] sm:$0x1] %vm33, %v32
    %s35 = scalar_lea.vmem %s0, 10
    %v36 = vld [vmem:[%s35] sm:$0x1]
    %37 = vrot.lane.b32.xlu0 %v36, 80
    %v38 = vpop.permute.xlu0 %37
    %vm39 = vcmask 720512
    %40 = vst.msk [vmem:[#allocation0] sm:$0x1] %vm39, %v38
    %s41 = scalar_lea.vmem %s0, 9
    %v42 = vld [vmem:[%s41] sm:$0x1]
    %43 = vrot.lane.b32.xlu0 %v42, 72
    %v44 = vpop.permute.xlu0 %43
    %vm45 = vcmask 654912
    %46 = vst.msk [vmem:[#allocation0] sm:$0x1] %vm45, %v44
    %s47 = scalar_lea.vmem %s0, 8
    %v48 = vld [vmem:[%s47] sm:$0x1]
    %49 = vrot.lane.b32.xlu0 %v48, 64
    %v50 = vpop.permute.xlu0 %49
    %vm51 = vcmask 589312
    %52 = vst.msk [vmem:[#allocation0] sm:$0x1] %vm51, %v50
    %s53 = scalar_lea.vmem %s0, 7
    %v54 = vld [vmem:[%s53] sm:$0x1]
    %55 = vrot.lane.b32.xlu0 %v54, 56
    %v56 = vpop.permute.xlu0 %55
    %vm57 = vcmask 523712
    %58 = vst.msk [vmem:[#allocation0] sm:$0x1] %vm57, %v56
    %s59 = scalar_lea.vmem %s0, 6
    %v60 = vld [vmem:[%s59] sm:$0x1]
    %61 = vrot.lane.b32.xlu0 %v60, 48
    %v62 = vpop.permute.xlu0 %61
    %vm63 = vcmask 458112
    %64 = vst.msk [vmem:[#allocation0] sm:$0x1] %vm63, %v62
    %s65 = scalar_lea.vmem %s0, 5
    %v66 = vld [vmem:[%s65] sm:$0x1]
    %67 = vrot.lane.b32.xlu0 %v66, 40
    %v68 = vpop.permute.xlu0 %67
    %vm69 = vcmask 392512
    %70 = vst.msk [vmem:[#allocation0] sm:$0x1] %vm69, %v68
    %s71 = scalar_lea.vmem %s0, 4
    %v72 = vld [vmem:[%s71] sm:$0x1]
    %73 = vrot.lane.b32.xlu0 %v72, 32
    %v74 = vpop.permute.xlu0 %73
    %vm75 = vcmask 326912
    %76 = vst.msk [vmem:[#allocation0] sm:$0x1] %vm75, %v74
    %s77 = scalar_lea.vmem %s0, 3
    %v78 = vld [vmem:[%s77] sm:$0x1]
    %79 = vrot.lane.b32.xlu0 %v78, 24
    %v80 = vpop.permute.xlu0 %79
    %vm81 = vcmask 261312
    %82 = vst.msk [vmem:[#allocation0] sm:$0x1] %vm81, %v80
    %s83 = scalar_lea.vmem %s0, 2
    %v84 = vld [vmem:[%s83] sm:$0x1]
    %85 = vrot.lane.b32.xlu0 %v84, 16
    %v86 = vpop.permute.xlu0 %85
    %vm87 = vcmask 195712
    %88 = vst.msk [vmem:[#allocation0] sm:$0x1] %vm87, %v86
    %s89 = scalar_lea.vmem %s0, 1
    %v90 = vld [vmem:[%s89] sm:$0x1]
    %91 = vrot.lane.b32.xlu0 %v90, 8
    %v92 = vpop.permute.xlu0 %91
    %vm93 = vcmask 130112
    %94 = vst.msk [vmem:[#allocation0] sm:$0x1] %vm93, %v92
    %s96 = ssub.s32 2, 1
    %v97 = vld [vmem:[#allocation0] sm:%s96]
    %s99 = ssub.s32 2, 1
    %100 = vst [vmem:[%s1] sm:%s99] %v97

// kernel: coupled_up_real_forward.3
$region0: #{coupled_up_real_forward.3}
  #allocation0 [shape = 'u32[]', space=smem, size = 0x4, offset = 0x4, fixed_abs, tag = 'smem constant byte address 0x4 - core index']
  #allocation1 [shape = 'u32[72,128]{1,0:T(1,128)}', space=vmem, size = 0x9000, scoped, tag = 'internal scratch']
  %s0 = inlined_call_operand.vmem [shape: f32[2,16,64], index: 0, kind: input, shape index: {}]
  %s1 = inlined_call_operand.vmem [shape: f32[3,64], index: 1, kind: input, shape index: {}]
  %s2 = inlined_call_operand.vmem [shape: bf16[3,64,128], index: 2, kind: input, shape index: {}]
  %s3 = inlined_call_operand.vmem [shape: bf16[2,16,128], index: 3, kind: output, shape index: {0}]
  %s4 = inlined_call_operand.vmem [shape: f32[2,128], index: 4, kind: output, shape index: {1}]
  %5 = xla_tuple %s3, %s4
  %s6 = sld [smem:[#allocation0]]
  $region30: #{coupled_up_real_forward.3} parent=0
    _
  %s8 = ssub.s32 1, %s6
  %s9 = scalar_select 0, %s8, %s6
  // Predicated region
  $region2: #{coupled_up_real_forward.3} parent=0 // pred_check
    _
  $region3: #{coupled_up_real_forward.3} parent=0 // pred_check_branch
    %11 = sbr.rel (0) target = $region5
  $region4: #{coupled_up_real_forward.3} parent=0 // pred_region
    _
  $region5: #{coupled_up_real_forward.3} parent=0 // pred_fallthru
    _
  // Predicated region
  $region6: #{coupled_up_real_forward.3} parent=0 // pred_check
    _
  $region7: #{coupled_up_real_forward.3} parent=0 // pred_check_branch
    %13 = sbr.rel (0) target = $region9
  $region8: #{coupled_up_real_forward.3} parent=0 // pred_region
    _
  $region9: #{coupled_up_real_forward.3} parent=0 // pred_fallthru
    _
  // Predicated region
  $region10: #{coupled_up_real_forward.3} parent=0 // pred_check
    _
  $region11: #{coupled_up_real_forward.3} parent=0 // pred_check_branch
    %15 = sbr.rel (0) target = $region13
  $region12: #{coupled_up_real_forward.3} parent=0 // pred_region
    _
  $region13: #{coupled_up_real_forward.3} parent=0 // pred_fallthru
    _
  %v17 = vld [vmem:[%s0] sm:$0xff]
  %v18 = vld [vmem:[%s0 + $0x8] sm:$0xff]
  %v19 = vld [vmem:[%s0 + $0x10] sm:$0xff]
  %v20 = vld [vmem:[%s0 + $0x18] sm:$0xff]
  %v21 = vld [vmem:[%s1] sm:$0x1]
  %v22 = vperm.slane %v21, 0
  %v23 = vsub.f32 %v17, %v22
  %v24 = vsub.f32 %v18, %v22
  %v25 = vsub.f32 %v19, %v22
  %v26 = vsub.f32 %v20, %v22
  %v27 = vld [vmem:[%s1 + $0x1] sm:$0x1]
  %v28 = vperm.slane %v27, 0
  %v29 = vmul.f32 %v23, %v28
  %v30 = vmul.f32 %v24, %v28
  %v31 = vmul.f32 %v25, %v28
  %v32 = vmul.f32 %v26, %v28
  %v33 = vld [vmem:[%s1 + $0x2] sm:$0x1]
  %v34 = vperm.slane %v33, 0
  %v35 = vadd.f32 %v29, %v34
  %v36 = vadd.f32 %v30, %v34
  %v37 = vadd.f32 %v31, %v34
  %v38 = vadd.f32 %v32, %v34
  %vm43 = vcmask 1040384
  %v44 = vrot.slane %v35, 7
  %v45 = vrot.slane %v36, 7
  %v46 = vsel %vm43, %v44, %v45
  %v47 = vrot.slane %v37, 7
  %v48 = vrot.slane %v38, 7
  %v49 = vsel %vm43, %v47, %v48
  %v56 = vsel %vm43, 0.0, %v44
  %v57 = vsel %vm43, 0.0, %v47
  %v58 = vsel %vm43, %v45, 0.0
  %v59 = vsel %vm43, %v48, 0.0
  %v60 = vpack.c.bf16 %v46, %v56
  %v61 = vpack.c.bf16 %v49, %v57
  %v62 = vld [vmem:[%s2] sm:$0xf]
  %v63 = vld [vmem:[%s2 + $0x4] sm:$0xf]
  %v64 = vld [vmem:[%s2 + $0x8] sm:$0xf]
  %v65 = vld [vmem:[%s2 + $0xc] sm:$0xf]
  %v66 = vld [vmem:[%s2 + $0x10] sm:$0xf]
  %v67 = vld [vmem:[%s2 + $0x14] sm:$0xf]
  %v68 = vld [vmem:[%s2 + $0x18] sm:$0xf]
  %v69 = vld [vmem:[%s2 + $0x1c] sm:$0xf]
  %vm74 = vcmask 1046528
  %v75 = vrot.slane %v56, 1
  %v76 = vrot.slane %v46, 1
  %v77 = vsel %vm74, %v75, %v76
  %v78 = vrot.slane %v58, 1
  %v79 = vsel %vm74, %v76, %v78
  %v80 = vrot.slane %v57, 1
  %v81 = vrot.slane %v49, 1
  %v82 = vsel %vm74, %v80, %v81
  %v83 = vrot.slane %v59, 1
  %v84 = vsel %vm74, %v81, %v83
  %v89 = vpack.c.bf16 %v79, %v77
  %v90 = vpack.c.bf16 %v84, %v82
  %s91 = scalar_lea.vmem %s2, 32
  %v92 = vld [vmem:[%s91] sm:$0xf]
  %v93 = vld [vmem:[%s91 + $0x4] sm:$0xf]
  %v94 = vld [vmem:[%s91 + $0x8] sm:$0xf]
  %v95 = vld [vmem:[%s91 + $0xc] sm:$0xf]
  %v96 = vld [vmem:[%s91 + $0x10] sm:$0xf]
  %v97 = vld [vmem:[%s91 + $0x14] sm:$0xf]
  %v98 = vld [vmem:[%s91 + $0x18] sm:$0xf]
  %v99 = vld [vmem:[%s91 + $0x1c] sm:$0xf]
  %v108 = vunpack.c.l.b16 %v92
  %v109 = vunpack.c.l.b16 %v93
  %v110 = vunpack.c.l.b16 %v94
  %v111 = vunpack.c.l.b16 %v95
  %v112 = vunpack.c.l.b16 %v96
  %v113 = vunpack.c.l.b16 %v97
  %v114 = vunpack.c.l.b16 %v98
  %v115 = vunpack.c.l.b16 %v99
  %v116 = vpack.c.b16 %v109, %v108
  %v117 = vpack.c.b16 %v111, %v110
  %v118 = vpack.c.b16 %v113, %v112
  %v119 = vpack.c.b16 %v115, %v114
  %vm124 = vcmask 523264
  %v126 = vsel %vm124, %v89, 0
  %v129 = vsel %vm124, %v90, 0
  %131 = vmatpush.bf16.msra.mxu0 0
  %132 = vmatpush.bf16.msra.mxu0 0
  %133 = vmatpush.bf16.msra.mxu0 0
  %134 = vmatpush.bf16.msra.mxu0 0
  %135 = vmatpush.bf16.msra.mxu0 %v119
  %136 = vmatpush.bf16.msra.mxu0 %v118
  %137 = vmatpush.bf16.msra.mxu0 %v117
  %138 = vmatpush.bf16.msra.mxu0 %v116
  %139 = vmatmul.bf16.gmra.mxu0 %v126
  %v140 = vpop.f32.mrf.mxu0
  %v141 = vadd.f32 0.0, %v140
  %v142 = vpop.f32.mrf.mxu0
  %v143 = vadd.f32 0.0, %v142
  %144 = vmatmul.bf16.gmra.mxu0 %v129
  %v145 = vpop.f32.mrf.mxu0
  %v146 = vadd.f32 0.0, %v145
  %v147 = vpop.f32.mrf.mxu0
  %v148 = vadd.f32 0.0, %v147
  %149 = vdwg.mxu0
  %v158 = vunpack.c.l.b16 %v62
  %v159 = vunpack.c.l.b16 %v63
  %v160 = vunpack.c.l.b16 %v64
  %v161 = vunpack.c.l.b16 %v65
  %v162 = vunpack.c.l.b16 %v66
  %v163 = vunpack.c.l.b16 %v67
  %v164 = vunpack.c.l.b16 %v68
  %v165 = vunpack.c.l.b16 %v69
  %v166 = vpack.c.b16 %v159, %v158
  %v167 = vpack.c.b16 %v161, %v160
  %v168 = vpack.c.b16 %v163, %v162
  %v169 = vpack.c.b16 %v165, %v164
  %v175 = vsel %vm124, %v60, 0
  %v178 = vsel %vm124, %v61, 0
  %180 = vmatpush.bf16.msra.mxu0 0
  %181 = vmatpush.bf16.msra.mxu0 0
  %182 = vmatpush.bf16.msra.mxu0 0
  %183 = vmatpush.bf16.msra.mxu0 0
  %184 = vmatpush.bf16.msra.mxu0 %v169
  %185 = vmatpush.bf16.msra.mxu0 %v168
  %186 = vmatpush.bf16.msra.mxu0 %v167
  %187 = vmatpush.bf16.msra.mxu0 %v166
  %188 = vmatmul.bf16.gmra.mxu0 %v175
  %v189 = vpop.f32.mrf.mxu0
  %v190 = vadd.f32 %v141, %v189
  %v191 = vpop.f32.mrf.mxu0
  %v192 = vadd.f32 %v143, %v191
  %193 = vmatmul.bf16.gmra.mxu0 %v178
  %v194 = vpop.f32.mrf.mxu0
  %v195 = vadd.f32 %v146, %v194
  %v196 = vpop.f32.mrf.mxu0
  %v197 = vadd.f32 %v148, %v196
  %198 = vdwg.mxu0
  %vm199 = vcmask 1045504
  %v200 = vrot.slane %v56, 2
  %v201 = vrot.slane %v46, 2
  %v202 = vsel %vm199, %v200, %v201
  %v203 = vrot.slane %v58, 2
  %v204 = vsel %vm199, %v201, %v203
  %v205 = vrot.slane %v57, 2
  %v206 = vrot.slane %v49, 2
  %v207 = vsel %vm199, %v205, %v206
  %v208 = vrot.slane %v59, 2
  %v209 = vsel %vm199, %v206, %v208
  %v214 = vpack.c.bf16 %v204, %v202
  %v215 = vpack.c.bf16 %v209, %v207
  %s216 = scalar_lea.vmem %s2, 64
  %v217 = vld [vmem:[%s216] sm:$0xf]
  %v218 = vld [vmem:[%s216 + $0x4] sm:$0xf]
  %v219 = vld [vmem:[%s216 + $0x8] sm:$0xf]
  %v220 = vld [vmem:[%s216 + $0xc] sm:$0xf]
  %v221 = vld [vmem:[%s216 + $0x10] sm:$0xf]
  %v222 = vld [vmem:[%s216 + $0x14] sm:$0xf]
  %v223 = vld [vmem:[%s216 + $0x18] sm:$0xf]
  %v224 = vld [vmem:[%s216 + $0x1c] sm:$0xf]
  %v233 = vunpack.c.l.b16 %v217
  %v234 = vunpack.c.l.b16 %v218
  %v235 = vunpack.c.l.b16 %v219
  %v236 = vunpack.c.l.b16 %v220
  %v237 = vunpack.c.l.b16 %v221
  %v238 = vunpack.c.l.b16 %v222
  %v239 = vunpack.c.l.b16 %v223
  %v240 = vunpack.c.l.b16 %v224
  %v241 = vpack.c.b16 %v234, %v233
  %v242 = vpack.c.b16 %v236, %v235
  %v243 = vpack.c.b16 %v238, %v237
  %v244 = vpack.c.b16 %v240, %v239
  %v250 = vsel %vm124, %v214, 0
  %v253 = vsel %vm124, %v215, 0
  %255 = vmatpush.bf16.msra.mxu0 0
  %256 = vmatpush.bf16.msra.mxu0 0
  %257 = vmatpush.bf16.msra.mxu0 0
  %258 = vmatpush.bf16.msra.mxu0 0
  %259 = vmatpush.bf16.msra.mxu0 %v244
  %260 = vmatpush.bf16.msra.mxu0 %v243
  %261 = vmatpush.bf16.msra.mxu0 %v242
  %262 = vmatpush.bf16.msra.mxu0 %v241
  %263 = vmatmul.bf16.gmra.mxu0 %v250
  %v264 = vpop.f32.mrf.mxu0
  %v265 = vadd.f32 0.0, %v264
  %v266 = vpop.f32.mrf.mxu0
  %v267 = vadd.f32 0.0, %v266
  %268 = vmatmul.bf16.gmra.mxu0 %v253
  %v269 = vpop.f32.mrf.mxu0
  %v270 = vadd.f32 0.0, %v269
  %v271 = vpop.f32.mrf.mxu0
  %v272 = vadd.f32 0.0, %v271
  %273 = vdwg.mxu0
  %v274 = vadd.f32 %v190, %v265
  %v275 = vadd.f32 %v192, %v267
  %v276 = vadd.f32 %v195, %v270
  %v277 = vadd.f32 %v197, %v272
  %v278 = vmax.f32 %v274, 0.0
  %v279 = vmax.f32 %v275, 0.0
  %v280 = vmax.f32 %v276, 0.0
  %v281 = vmax.f32 %v277, 0.0
  %v282 = vpack.c.bf16 %v278, %v278
  %v283 = vpack.c.bf16 %v279, %v279
  %v284 = vpack.c.bf16 %v280, %v280
  %v285 = vpack.c.bf16 %v281, %v281
  %286 = vst [vmem:[%s3] sm:$0xf] %v282
  %287 = vst [vmem:[%s3 + $0x4] sm:$0xf] %v283
  %288 = vst [vmem:[%s3 + $0x8] sm:$0xf] %v284
  %289 = vst [vmem:[%s3 + $0xc] sm:$0xf] %v285
  %v290 = vadd.f32 %v278, %v279
  %v291 = vadd.f32 %v290, %v280
  %v292 = vadd.f32 %v291, %v281
  %v293 = vrot.slane %v292, 4
  %v294 = vadd.f32 %v292, %v293
  %v295 = vrot.slane %v294, 2
  %v296 = vadd.f32 %v294, %v295
  %v297 = vrot.slane %v296, 1
  %v298 = vadd.f32 %v296, %v297
  %v299 = vmul.f32 %v278, %v278
  %v300 = vmul.f32 %v279, %v279
  %v301 = vmul.f32 %v280, %v280
  %v302 = vmul.f32 %v281, %v281
  %v303 = vadd.f32 %v299, %v300
  %v304 = vadd.f32 %v303, %v301
  %v305 = vadd.f32 %v304, %v302
  %v306 = vrot.slane %v305, 4
  %v307 = vadd.f32 %v305, %v306
  %v308 = vrot.slane %v307, 2
  %v309 = vadd.f32 %v307, %v308
  %v310 = vrot.slane %v309, 1
  %v311 = vadd.f32 %v309, %v310
  %v312 = vsel %vm43, %v298, %v311
  %313 = vst [vmem:[%s4] sm:$0x3] %v312
  // Predicated region
  $region14: #{coupled_up_real_forward.3} parent=0 // pred_check
    _
  $region15: #{coupled_up_real_forward.3} parent=0 // pred_check_branch
    %315 = sbr.rel (0) target = $region17
  $region16: #{coupled_up_real_forward.3} parent=0 // pred_region
    _
  $region17: #{coupled_up_real_forward.3} parent=0 // pred_fallthru
    _
  // Predicated region
  $region18: #{coupled_up_real_forward.3} parent=0 // pred_check
    _
  $region19: #{coupled_up_real_forward.3} parent=0 // pred_check_branch
    %317 = sbr.rel (0) target = $region21
  $region20: #{coupled_up_real_forward.3} parent=0 // pred_region
    _
  $region21: #{coupled_up_real_forward.3} parent=0 // pred_fallthru
    _
  // Predicated region
  $region22: #{coupled_up_real_forward.3} parent=0 // pred_check
    _
  $region23: #{coupled_up_real_forward.3} parent=0 // pred_check_branch
    %319 = sbr.rel (0) target = $region25
  $region24: #{coupled_up_real_forward.3} parent=0 // pred_region
    _
  $region25: #{coupled_up_real_forward.3} parent=0 // pred_fallthru
    _
  // Predicated region
  $region26: #{coupled_up_real_forward.3} parent=0 // pred_check
    _
  $region27: #{coupled_up_real_forward.3} parent=0 // pred_check_branch
    %321 = sbr.rel (0) target = $region29
  $region28: #{coupled_up_real_forward.3} parent=0 // pred_region
    _
  $region29: #{coupled_up_real_forward.3} parent=0 // pred_fallthru
    _

// kernel: coupled_up_real_forward.4
$region0: #{coupled_up_real_forward.4}
  #allocation0 [shape = 'u32[]', space=smem, size = 0x4, offset = 0x4, fixed_abs, tag = 'smem constant byte address 0x4 - core index']
  #allocation1 [shape = 'u32[72,128]{1,0:T(1,128)}', space=vmem, size = 0x9000, scoped, tag = 'internal scratch']
  %s0 = inlined_call_operand.vmem [shape: bf16[2,16,128], index: 0, kind: input, shape index: {}]
  %s1 = inlined_call_operand.vmem [shape: f32[3,128], index: 1, kind: input, shape index: {}]
  %s2 = inlined_call_operand.vmem [shape: bf16[3,128,128], index: 2, kind: input, shape index: {}]
  %s3 = inlined_call_operand.vmem [shape: bf16[2,16,128], index: 3, kind: output, shape index: {0}]
  %s4 = inlined_call_operand.vmem [shape: f32[2,128], index: 4, kind: output, shape index: {1}]
  %5 = xla_tuple %s3, %s4
  %s6 = sld [smem:[#allocation0]]
  $region30: #{coupled_up_real_forward.4} parent=0
    _
  %s8 = ssub.s32 1, %s6
  %s9 = scalar_select 0, %s8, %s6
  // Predicated region
  $region2: #{coupled_up_real_forward.4} parent=0 // pred_check
    _
  $region3: #{coupled_up_real_forward.4} parent=0 // pred_check_branch
    %11 = sbr.rel (0) target = $region5
  $region4: #{coupled_up_real_forward.4} parent=0 // pred_region
    _
  $region5: #{coupled_up_real_forward.4} parent=0 // pred_fallthru
    _
  // Predicated region
  $region6: #{coupled_up_real_forward.4} parent=0 // pred_check
    _
  $region7: #{coupled_up_real_forward.4} parent=0 // pred_check_branch
    %13 = sbr.rel (0) target = $region9
  $region8: #{coupled_up_real_forward.4} parent=0 // pred_region
    _
  $region9: #{coupled_up_real_forward.4} parent=0 // pred_fallthru
    _
  // Predicated region
  $region10: #{coupled_up_real_forward.4} parent=0 // pred_check
    _
  $region11: #{coupled_up_real_forward.4} parent=0 // pred_check_branch
    %15 = sbr.rel (0) target = $region13
  $region12: #{coupled_up_real_forward.4} parent=0 // pred_region
    _
  $region13: #{coupled_up_real_forward.4} parent=0 // pred_fallthru
    _
  %v16 = vld [vmem:[%s0] sm:$0xf]
  %v17 = vld [vmem:[%s0 + $0x4] sm:$0xf]
  %v18 = vld [vmem:[%s0 + $0x8] sm:$0xf]
  %v19 = vld [vmem:[%s0 + $0xc] sm:$0xf]
  %v20 = vunpack.c.l.bf16 %v16
  %v21 = vunpack.c.l.bf16 %v17
  %v22 = vunpack.c.l.bf16 %v18
  %v23 = vunpack.c.l.bf16 %v19
  %v24 = vld [vmem:[%s1] sm:$0x1]
  %v25 = vperm.slane %v24, 0
  %v26 = vsub.f32 %v20, %v25
  %v27 = vsub.f32 %v21, %v25
  %v28 = vsub.f32 %v22, %v25
  %v29 = vsub.f32 %v23, %v25
  %v30 = vld [vmem:[%s1 + $0x1] sm:$0x1]
  %v31 = vperm.slane %v30, 0
  %v32 = vmul.f32 %v26, %v31
  %v33 = vmul.f32 %v27, %v31
  %v34 = vmul.f32 %v28, %v31
  %v35 = vmul.f32 %v29, %v31
  %v36 = vld [vmem:[%s1 + $0x2] sm:$0x1]
  %v37 = vperm.slane %v36, 0
  %v38 = vadd.f32 %v32, %v37
  %v39 = vadd.f32 %v33, %v37
  %v40 = vadd.f32 %v34, %v37
  %v41 = vadd.f32 %v35, %v37
  %vm46 = vcmask 1040384
  %v47 = vrot.slane %v38, 7
  %v48 = vrot.slane %v39, 7
  %v49 = vsel %vm46, %v47, %v48
  %v50 = vrot.slane %v40, 7
  %v51 = vrot.slane %v41, 7
  %v52 = vsel %vm46, %v50, %v51
  %v59 = vsel %vm46, 0.0, %v47
  %v60 = vsel %vm46, 0.0, %v50
  %v61 = vsel %vm46, %v48, 0.0
  %v62 = vsel %vm46, %v51, 0.0
  %v63 = vpack.c.bf16 %v49, %v59
  %v64 = vpack.c.bf16 %v52, %v60
  %v65 = vld [vmem:[%s2] sm:$0xf]
  %v66 = vld [vmem:[%s2 + $0x4] sm:$0xf]
  %v67 = vld [vmem:[%s2 + $0x8] sm:$0xf]
  %v68 = vld [vmem:[%s2 + $0xc] sm:$0xf]
  %v69 = vld [vmem:[%s2 + $0x10] sm:$0xf]
  %v70 = vld [vmem:[%s2 + $0x14] sm:$0xf]
  %v71 = vld [vmem:[%s2 + $0x18] sm:$0xf]
  %v72 = vld [vmem:[%s2 + $0x1c] sm:$0xf]
  %v73 = vld [vmem:[%s2 + $0x20] sm:$0xf]
  %v74 = vld [vmem:[%s2 + $0x24] sm:$0xf]
  %v75 = vld [vmem:[%s2 + $0x28] sm:$0xf]
  %v76 = vld [vmem:[%s2 + $0x2c] sm:$0xf]
  %v77 = vld [vmem:[%s2 + $0x30] sm:$0xf]
  %v78 = vld [vmem:[%s2 + $0x34] sm:$0xf]
  %v79 = vld [vmem:[%s2 + $0x38] sm:$0xf]
  %v80 = vld [vmem:[%s2 + $0x3c] sm:$0xf]
  %vm85 = vcmask 1046528
  %v86 = vrot.slane %v59, 1
  %v87 = vrot.slane %v49, 1
  %v88 = vsel %vm85, %v86, %v87
  %v89 = vrot.slane %v61, 1
  %v90 = vsel %vm85, %v87, %v89
  %v91 = vrot.slane %v60, 1
  %v92 = vrot.slane %v52, 1
  %v93 = vsel %vm85, %v91, %v92
  %v94 = vrot.slane %v62, 1
  %v95 = vsel %vm85, %v92, %v94
  %v100 = vpack.c.bf16 %v90, %v88
  %v101 = vpack.c.bf16 %v95, %v93
  %s102 = scalar_lea.vmem %s2, 64
  %v103 = vld [vmem:[%s102] sm:$0xf]
  %v104 = vld [vmem:[%s102 + $0x4] sm:$0xf]
  %v105 = vld [vmem:[%s102 + $0x8] sm:$0xf]
  %v106 = vld [vmem:[%s102 + $0xc] sm:$0xf]
  %v107 = vld [vmem:[%s102 + $0x10] sm:$0xf]
  %v108 = vld [vmem:[%s102 + $0x14] sm:$0xf]
  %v109 = vld [vmem:[%s102 + $0x18] sm:$0xf]
  %v110 = vld [vmem:[%s102 + $0x1c] sm:$0xf]
  %v111 = vld [vmem:[%s102 + $0x20] sm:$0xf]
  %v112 = vld [vmem:[%s102 + $0x24] sm:$0xf]
  %v113 = vld [vmem:[%s102 + $0x28] sm:$0xf]
  %v114 = vld [vmem:[%s102 + $0x2c] sm:$0xf]
  %v115 = vld [vmem:[%s102 + $0x30] sm:$0xf]
  %v116 = vld [vmem:[%s102 + $0x34] sm:$0xf]
  %v117 = vld [vmem:[%s102 + $0x38] sm:$0xf]
  %v118 = vld [vmem:[%s102 + $0x3c] sm:$0xf]
  %v135 = vunpack.c.l.b16 %v103
  %v136 = vunpack.c.l.b16 %v104
  %v137 = vunpack.c.l.b16 %v105
  %v138 = vunpack.c.l.b16 %v106
  %v139 = vunpack.c.l.b16 %v107
  %v140 = vunpack.c.l.b16 %v108
  %v141 = vunpack.c.l.b16 %v109
  %v142 = vunpack.c.l.b16 %v110
  %v143 = vunpack.c.l.b16 %v111
  %v144 = vunpack.c.l.b16 %v112
  %v145 = vunpack.c.l.b16 %v113
  %v146 = vunpack.c.l.b16 %v114
  %v147 = vunpack.c.l.b16 %v115
  %v148 = vunpack.c.l.b16 %v116
  %v149 = vunpack.c.l.b16 %v117
  %v150 = vunpack.c.l.b16 %v118
  %v151 = vpack.c.b16 %v136, %v135
  %v152 = vpack.c.b16 %v138, %v137
  %v153 = vpack.c.b16 %v140, %v139
  %v154 = vpack.c.b16 %v142, %v141
  %v155 = vpack.c.b16 %v144, %v143
  %v156 = vpack.c.b16 %v146, %v145
  %v157 = vpack.c.b16 %v148, %v147
  %v158 = vpack.c.b16 %v150, %v149
  %167 = vmatpush.bf16.msra.mxu0 %v158
  %168 = vmatpush.bf16.msra.mxu0 %v157
  %169 = vmatpush.bf16.msra.mxu0 %v156
  %170 = vmatpush.bf16.msra.mxu0 %v155
  %171 = vmatpush.bf16.msra.mxu0 %v154
  %172 = vmatpush.bf16.msra.mxu0 %v153
  %173 = vmatpush.bf16.msra.mxu0 %v152
  %174 = vmatpush.bf16.msra.mxu0 %v151
  %175 = vmatmul.bf16.gmra.mxu0 %v100
  %v176 = vpop.f32.mrf.mxu0
  %v177 = vadd.f32 0.0, %v176
  %v178 = vpop.f32.mrf.mxu0
  %v179 = vadd.f32 0.0, %v178
  %180 = vmatmul.bf16.gmra.mxu0 %v101
  %v181 = vpop.f32.mrf.mxu0
  %v182 = vadd.f32 0.0, %v181
  %v183 = vpop.f32.mrf.mxu0
  %v184 = vadd.f32 0.0, %v183
  %185 = vdwg.mxu0
  %v202 = vunpack.c.l.b16 %v65
  %v203 = vunpack.c.l.b16 %v66
  %v204 = vunpack.c.l.b16 %v67
  %v205 = vunpack.c.l.b16 %v68
  %v206 = vunpack.c.l.b16 %v69
  %v207 = vunpack.c.l.b16 %v70
  %v208 = vunpack.c.l.b16 %v71
  %v209 = vunpack.c.l.b16 %v72
  %v210 = vunpack.c.l.b16 %v73
  %v211 = vunpack.c.l.b16 %v74
  %v212 = vunpack.c.l.b16 %v75
  %v213 = vunpack.c.l.b16 %v76
  %v214 = vunpack.c.l.b16 %v77
  %v215 = vunpack.c.l.b16 %v78
  %v216 = vunpack.c.l.b16 %v79
  %v217 = vunpack.c.l.b16 %v80
  %v218 = vpack.c.b16 %v203, %v202
  %v219 = vpack.c.b16 %v205, %v204
  %v220 = vpack.c.b16 %v207, %v206
  %v221 = vpack.c.b16 %v209, %v208
  %v222 = vpack.c.b16 %v211, %v210
  %v223 = vpack.c.b16 %v213, %v212
  %v224 = vpack.c.b16 %v215, %v214
  %v225 = vpack.c.b16 %v217, %v216
  %234 = vmatpush.bf16.msra.mxu0 %v225
  %235 = vmatpush.bf16.msra.mxu0 %v224
  %236 = vmatpush.bf16.msra.mxu0 %v223
  %237 = vmatpush.bf16.msra.mxu0 %v222
  %238 = vmatpush.bf16.msra.mxu0 %v221
  %239 = vmatpush.bf16.msra.mxu0 %v220
  %240 = vmatpush.bf16.msra.mxu0 %v219
  %241 = vmatpush.bf16.msra.mxu0 %v218
  %242 = vmatmul.bf16.gmra.mxu0 %v63
  %v243 = vpop.f32.mrf.mxu0
  %v244 = vadd.f32 %v177, %v243
  %v245 = vpop.f32.mrf.mxu0
  %v246 = vadd.f32 %v179, %v245
  %247 = vmatmul.bf16.gmra.mxu0 %v64
  %v248 = vpop.f32.mrf.mxu0
  %v249 = vadd.f32 %v182, %v248
  %v250 = vpop.f32.mrf.mxu0
  %v251 = vadd.f32 %v184, %v250
  %252 = vdwg.mxu0
  %vm253 = vcmask 1045504
  %v254 = vrot.slane %v59, 2
  %v255 = vrot.slane %v49, 2
  %v256 = vsel %vm253, %v254, %v255
  %v257 = vrot.slane %v61, 2
  %v258 = vsel %vm253, %v255, %v257
  %v259 = vrot.slane %v60, 2
  %v260 = vrot.slane %v52, 2
  %v261 = vsel %vm253, %v259, %v260
  %v262 = vrot.slane %v62, 2
  %v263 = vsel %vm253, %v260, %v262
  %v268 = vpack.c.bf16 %v258, %v256
  %v269 = vpack.c.bf16 %v263, %v261
  %s270 = scalar_lea.vmem %s2, 128
  %v271 = vld [vmem:[%s270] sm:$0xf]
  %v272 = vld [vmem:[%s270 + $0x4] sm:$0xf]
  %v273 = vld [vmem:[%s270 + $0x8] sm:$0xf]
  %v274 = vld [vmem:[%s270 + $0xc] sm:$0xf]
  %v275 = vld [vmem:[%s270 + $0x10] sm:$0xf]
  %v276 = vld [vmem:[%s270 + $0x14] sm:$0xf]
  %v277 = vld [vmem:[%s270 + $0x18] sm:$0xf]
  %v278 = vld [vmem:[%s270 + $0x1c] sm:$0xf]
  %v279 = vld [vmem:[%s270 + $0x20] sm:$0xf]
  %v280 = vld [vmem:[%s270 + $0x24] sm:$0xf]
  %v281 = vld [vmem:[%s270 + $0x28] sm:$0xf]
  %v282 = vld [vmem:[%s270 + $0x2c] sm:$0xf]
  %v283 = vld [vmem:[%s270 + $0x30] sm:$0xf]
  %v284 = vld [vmem:[%s270 + $0x34] sm:$0xf]
  %v285 = vld [vmem:[%s270 + $0x38] sm:$0xf]
  %v286 = vld [vmem:[%s270 + $0x3c] sm:$0xf]
  %v303 = vunpack.c.l.b16 %v271
  %v304 = vunpack.c.l.b16 %v272
  %v305 = vunpack.c.l.b16 %v273
  %v306 = vunpack.c.l.b16 %v274
  %v307 = vunpack.c.l.b16 %v275
  %v308 = vunpack.c.l.b16 %v276
  %v309 = vunpack.c.l.b16 %v277
  %v310 = vunpack.c.l.b16 %v278
  %v311 = vunpack.c.l.b16 %v279
  %v312 = vunpack.c.l.b16 %v280
  %v313 = vunpack.c.l.b16 %v281
  %v314 = vunpack.c.l.b16 %v282
  %v315 = vunpack.c.l.b16 %v283
  %v316 = vunpack.c.l.b16 %v284
  %v317 = vunpack.c.l.b16 %v285
  %v318 = vunpack.c.l.b16 %v286
  %v319 = vpack.c.b16 %v304, %v303
  %v320 = vpack.c.b16 %v306, %v305
  %v321 = vpack.c.b16 %v308, %v307
  %v322 = vpack.c.b16 %v310, %v309
  %v323 = vpack.c.b16 %v312, %v311
  %v324 = vpack.c.b16 %v314, %v313
  %v325 = vpack.c.b16 %v316, %v315
  %v326 = vpack.c.b16 %v318, %v317
  %335 = vmatpush.bf16.msra.mxu0 %v326
  %336 = vmatpush.bf16.msra.mxu0 %v325
  %337 = vmatpush.bf16.msra.mxu0 %v324
  %338 = vmatpush.bf16.msra.mxu0 %v323
  %339 = vmatpush.bf16.msra.mxu0 %v322
  %340 = vmatpush.bf16.msra.mxu0 %v321
  %341 = vmatpush.bf16.msra.mxu0 %v320
  %342 = vmatpush.bf16.msra.mxu0 %v319
  %343 = vmatmul.bf16.gmra.mxu0 %v268
  %v344 = vpop.f32.mrf.mxu0
  %v345 = vadd.f32 0.0, %v344
  %v346 = vpop.f32.mrf.mxu0
  %v347 = vadd.f32 0.0, %v346
  %348 = vmatmul.bf16.gmra.mxu0 %v269
  %v349 = vpop.f32.mrf.mxu0
  %v350 = vadd.f32 0.0, %v349
  %v351 = vpop.f32.mrf.mxu0
  %v352 = vadd.f32 0.0, %v351
  %353 = vdwg.mxu0
  %v354 = vadd.f32 %v244, %v345
  %v355 = vadd.f32 %v246, %v347
  %v356 = vadd.f32 %v249, %v350
  %v357 = vadd.f32 %v251, %v352
  %v358 = vmax.f32 %v354, 0.0
  %v359 = vmax.f32 %v355, 0.0
  %v360 = vmax.f32 %v356, 0.0
  %v361 = vmax.f32 %v357, 0.0
  %v362 = vpack.c.bf16 %v358, %v358
  %v363 = vpack.c.bf16 %v359, %v359
  %v364 = vpack.c.bf16 %v360, %v360
  %v365 = vpack.c.bf16 %v361, %v361
  %366 = vst [vmem:[%s3] sm:$0xf] %v362
  %367 = vst [vmem:[%s3 + $0x4] sm:$0xf] %v363
  %368 = vst [vmem:[%s3 + $0x8] sm:$0xf] %v364
  %369 = vst [vmem:[%s3 + $0xc] sm:$0xf] %v365
  %v370 = vadd.f32 %v358, %v359
  %v371 = vadd.f32 %v370, %v360
  %v372 = vadd.f32 %v371, %v361
  %v373 = vrot.slane %v372, 4
  %v374 = vadd.f32 %v372, %v373
  %v375 = vrot.slane %v374, 2
  %v376 = vadd.f32 %v374, %v375
  %v377 = vrot.slane %v376, 1
  %v378 = vadd.f32 %v376, %v377
  %v379 = vmul.f32 %v358, %v358
  %v380 = vmul.f32 %v359, %v359
  %v381 = vmul.f32 %v360, %v360
  %v382 = vmul.f32 %v361, %v361
  %v383 = vadd.f32 %v379, %v380
  %v384 = vadd.f32 %v383, %v381
  %v385 = vadd.f32 %v384, %v382
  %v386 = vrot.slane %v385, 4
  %v387 = vadd.f32 %v385, %v386
  %v388 = vrot.slane %v387, 2
  %v389 = vadd.f32 %v387, %v388
  %v390 = vrot.slane %v389, 1
  %v391 = vadd.f32 %v389, %v390
  %v392 = vsel %vm46, %v378, %v391
  %393 = vst [vmem:[%s4] sm:$0x3] %v392
  // Predicated region
  $region14: #{coupled_up_real_forward.4} parent=0 // pred_check
    _
  $region15: #{coupled_up_real_forward.4} parent=0 // pred_check_branch
    %395 = sbr.rel (0) target = $region17
  $region16: #{coupled_up_real_forward.4} parent=0 // pred_region
    _
  $region17: #{coupled_up_real_forward.4} parent=0 // pred_fallthru
    _
  // Predicated region
  $region18: #{coupled_up_real_forward.4} parent=0 // pred_check
    _
  $region19: #{coupled_up_real_forward.4} parent=0 // pred_check_branch
    %397 = sbr.rel (0) target = $region21
  $region20: #{coupled_up_real_forward.4} parent=0 // pred_region
    _
  $region21: #{coupled_up_real_forward.4} parent=0 // pred_fallthru
    _
  // Predicated region
  $region22: #{coupled_up_real_forward.4} parent=0 // pred_check
    _
  $region23: #{coupled_up_real_forward.4} parent=0 // pred_check_branch
    %399 = sbr.rel (0) target = $region25
  $region24: #{coupled_up_real_forward.4} parent=0 // pred_region
    _
  $region25: #{coupled_up_real_forward.4} parent=0 // pred_fallthru
    _
  // Predicated region
  $region26: #{coupled_up_real_forward.4} parent=0 // pred_check
    _
  $region27: #{coupled_up_real_forward.4} parent=0 // pred_check_branch
    %401 = sbr.rel (0) target = $region29
  $region28: #{coupled_up_real_forward.4} parent=0 // pred_region
    _
  $region29: #{coupled_up_real_forward.4} parent=0 // pred_fallthru
    _

// kernel: coupled_up_real_forward.5
$region0: #{coupled_up_real_forward.5}
  #allocation0 [shape = 'u32[]', space=smem, size = 0x4, offset = 0x4, fixed_abs, tag = 'smem constant byte address 0x4 - core index']
  #allocation1 [shape = 'u32[72,128]{1,0:T(1,128)}', space=vmem, size = 0x9000, scoped, tag = 'internal scratch']
  %s0 = inlined_call_operand.vmem [shape: bf16[32,128], index: 0, kind: input, shape index: {}]
  %s1 = inlined_call_operand.vmem [shape: f32[3,128], index: 1, kind: input, shape index: {}]
  %s2 = inlined_call_operand.vmem [shape: f32[128,256], index: 2, kind: input, shape index: {}]
  %s3 = inlined_call_operand.vmem [shape: f32[64,32], index: 3, kind: input, shape index: {}]
  %s4 = inlined_call_operand.vmem [shape: f32[64,256], index: 4, kind: output, shape index: {}]
  %s5 = sld [smem:[#allocation0]]
  $region26: #{coupled_up_real_forward.5} parent=0
    _
  %s7 = ssub.s32 1, %s5
  %s8 = scalar_select 0, %s7, %s5
  // Predicated region
  $region2: #{coupled_up_real_forward.5} parent=0 // pred_check
    _
  $region3: #{coupled_up_real_forward.5} parent=0 // pred_check_branch
    %10 = sbr.rel (0) target = $region5
  $region4: #{coupled_up_real_forward.5} parent=0 // pred_region
    _
  $region5: #{coupled_up_real_forward.5} parent=0 // pred_fallthru
    _
  // Predicated region
  $region6: #{coupled_up_real_forward.5} parent=0 // pred_check
    _
  $region7: #{coupled_up_real_forward.5} parent=0 // pred_check_branch
    %12 = sbr.rel (0) target = $region9
  $region8: #{coupled_up_real_forward.5} parent=0 // pred_region
    _
  $region9: #{coupled_up_real_forward.5} parent=0 // pred_fallthru
    _
  // Predicated region
  $region10: #{coupled_up_real_forward.5} parent=0 // pred_check
    _
  $region11: #{coupled_up_real_forward.5} parent=0 // pred_check_branch
    %14 = sbr.rel (0) target = $region13
  $region12: #{coupled_up_real_forward.5} parent=0 // pred_region
    _
  $region13: #{coupled_up_real_forward.5} parent=0 // pred_fallthru
    _
  // Predicated region
  $region14: #{coupled_up_real_forward.5} parent=0 // pred_check
    _
  $region15: #{coupled_up_real_forward.5} parent=0 // pred_check_branch
    %16 = sbr.rel (0) target = $region17
  $region16: #{coupled_up_real_forward.5} parent=0 // pred_region
    _
  $region17: #{coupled_up_real_forward.5} parent=0 // pred_fallthru
    _
  %v17 = vld [vmem:[%s0] sm:$0xf]
  %v18 = vld [vmem:[%s0 + $0x4] sm:$0xf]
  %v19 = vld [vmem:[%s0 + $0x8] sm:$0xf]
  %v20 = vld [vmem:[%s0 + $0xc] sm:$0xf]
  %v21 = vunpack.c.l.bf16 %v17
  %v22 = vunpack.c.l.bf16 %v18
  %v23 = vunpack.c.l.bf16 %v19
  %v24 = vunpack.c.l.bf16 %v20
  %v25 = vld [vmem:[%s1] sm:$0x1]
  %v26 = vperm.slane %v25, 0
  %v27 = vsub.f32 %v21, %v26
  %v28 = vsub.f32 %v22, %v26
  %v29 = vsub.f32 %v23, %v26
  %v30 = vsub.f32 %v24, %v26
  %v31 = vld [vmem:[%s1 + $0x1] sm:$0x1]
  %v32 = vperm.slane %v31, 0
  %v33 = vmul.f32 %v27, %v32
  %v34 = vmul.f32 %v28, %v32
  %v35 = vmul.f32 %v29, %v32
  %v36 = vmul.f32 %v30, %v32
  %v37 = vld [vmem:[%s1 + $0x2] sm:$0x1]
  %v38 = vperm.slane %v37, 0
  %v39 = vadd.f32 %v33, %v38
  %v40 = vadd.f32 %v34, %v38
  %v41 = vadd.f32 %v35, %v38
  %v42 = vadd.f32 %v36, %v38
  %v43 = vld [vmem:[%s2] sm:$0xff]
  %v44 = vld [vmem:[%s2 + $0x8] sm:$0xff]
  %v45 = vld [vmem:[%s2 + $0x10] sm:$0xff]
  %v46 = vld [vmem:[%s2 + $0x18] sm:$0xff]
  %v47 = vld [vmem:[%s2 + $0x20] sm:$0xff]
  %v48 = vld [vmem:[%s2 + $0x28] sm:$0xff]
  %v49 = vld [vmem:[%s2 + $0x30] sm:$0xff]
  %v50 = vld [vmem:[%s2 + $0x38] sm:$0xff]
  %v51 = vld [vmem:[%s2 + $0x40] sm:$0xff]
  %v52 = vld [vmem:[%s2 + $0x48] sm:$0xff]
  %v53 = vld [vmem:[%s2 + $0x50] sm:$0xff]
  %v54 = vld [vmem:[%s2 + $0x58] sm:$0xff]
  %v55 = vld [vmem:[%s2 + $0x60] sm:$0xff]
  %v56 = vld [vmem:[%s2 + $0x68] sm:$0xff]
  %v57 = vld [vmem:[%s2 + $0x70] sm:$0xff]
  %v58 = vld [vmem:[%s2 + $0x78] sm:$0xff]
  %v59 = vld [vmem:[%s2 + $0x80] sm:$0xff]
  %v60 = vld [vmem:[%s2 + $0x88] sm:$0xff]
  %v61 = vld [vmem:[%s2 + $0x90] sm:$0xff]
  %v62 = vld [vmem:[%s2 + $0x98] sm:$0xff]
  %v63 = vld [vmem:[%s2 + $0xa0] sm:$0xff]
  %v64 = vld [vmem:[%s2 + $0xa8] sm:$0xff]
  %v65 = vld [vmem:[%s2 + $0xb0] sm:$0xff]
  %v66 = vld [vmem:[%s2 + $0xb8] sm:$0xff]
  %v67 = vld [vmem:[%s2 + $0xc0] sm:$0xff]
  %v68 = vld [vmem:[%s2 + $0xc8] sm:$0xff]
  %v69 = vld [vmem:[%s2 + $0xd0] sm:$0xff]
  %v70 = vld [vmem:[%s2 + $0xd8] sm:$0xff]
  %v71 = vld [vmem:[%s2 + $0xe0] sm:$0xff]
  %v72 = vld [vmem:[%s2 + $0xe8] sm:$0xff]
  %v73 = vld [vmem:[%s2 + $0xf0] sm:$0xff]
  %v74 = vld [vmem:[%s2 + $0xf8] sm:$0xff]
  %75 = vmatpush.msra.mxu0 %v73
  %76 = vmatpush.msra.mxu0 %v71
  %77 = vmatpush.msra.mxu0 %v69
  %78 = vmatpush.msra.mxu0 %v67
  %79 = vmatpush.msra.mxu0 %v65
  %80 = vmatpush.msra.mxu0 %v63
  %81 = vmatpush.msra.mxu0 %v61
  %82 = vmatpush.msra.mxu0 %v59
  %83 = vmatpush.msra.mxu0 %v57
  %84 = vmatpush.msra.mxu0 %v55
  %85 = vmatpush.msra.mxu0 %v53
  %86 = vmatpush.msra.mxu0 %v51
  %87 = vmatpush.msra.mxu0 %v49
  %88 = vmatpush.msra.mxu0 %v47
  %89 = vmatpush.msra.mxu0 %v45
  %90 = vmatpush.msra.mxu0 %v43
  %91 = vmatmul.f32.gmra.mxu0 %v39
  %v92 = vpop.f32.mrf.mxu0
  %v93 = vadd.f32 0.0, %v92
  %94 = vmatmul.f32.gmra.mxu0 %v40
  %v95 = vpop.f32.mrf.mxu0
  %v96 = vadd.f32 0.0, %v95
  %97 = vmatmul.f32.gmra.mxu0 %v41
  %v98 = vpop.f32.mrf.mxu0
  %v99 = vadd.f32 0.0, %v98
  %100 = vmatmul.f32.gmra.mxu0 %v42
  %v101 = vpop.f32.mrf.mxu0
  %v102 = vadd.f32 0.0, %v101
  %103 = vdwg.mxu0
  %104 = vmatpush.msra.mxu0 %v74
  %105 = vmatpush.msra.mxu0 %v72
  %106 = vmatpush.msra.mxu0 %v70
  %107 = vmatpush.msra.mxu0 %v68
  %108 = vmatpush.msra.mxu0 %v66
  %109 = vmatpush.msra.mxu0 %v64
  %110 = vmatpush.msra.mxu0 %v62
  %111 = vmatpush.msra.mxu0 %v60
  %112 = vmatpush.msra.mxu0 %v58
  %113 = vmatpush.msra.mxu0 %v56
  %114 = vmatpush.msra.mxu0 %v54
  %115 = vmatpush.msra.mxu0 %v52
  %116 = vmatpush.msra.mxu0 %v50
  %117 = vmatpush.msra.mxu0 %v48
  %118 = vmatpush.msra.mxu0 %v46
  %119 = vmatpush.msra.mxu0 %v44
  %120 = vmatmul.f32.gmra.mxu0 %v39
  %v121 = vpop.f32.mrf.mxu0
  %v122 = vadd.f32 0.0, %v121
  %123 = vmatmul.f32.gmra.mxu0 %v40
  %v124 = vpop.f32.mrf.mxu0
  %v125 = vadd.f32 0.0, %v124
  %126 = vmatmul.f32.gmra.mxu0 %v41
  %v127 = vpop.f32.mrf.mxu0
  %v128 = vadd.f32 0.0, %v127
  %129 = vmatmul.f32.gmra.mxu0 %v42
  %v130 = vpop.f32.mrf.mxu0
  %v131 = vadd.f32 0.0, %v130
  %132 = vdwg.mxu0
  %v133 = vld [vmem:[%s3] sm:$0xff]
  %v134 = vld [vmem:[%s3 + $0x8] sm:$0xff]
  %v135 = vld [vmem:[%s3 + $0x10] sm:$0xff]
  %v136 = vld [vmem:[%s3 + $0x18] sm:$0xff]
  %v137 = vld [vmem:[%s3 + $0x20] sm:$0xff]
  %v138 = vld [vmem:[%s3 + $0x28] sm:$0xff]
  %v139 = vld [vmem:[%s3 + $0x30] sm:$0xff]
  %v140 = vld [vmem:[%s3 + $0x38] sm:$0xff]
  %vm141 = vcmask 261120
  %v143 = vsel %vm141, %v133, 0
  %v146 = vsel %vm141, %v134, 0
  %v149 = vsel %vm141, %v135, 0
  %v152 = vsel %vm141, %v136, 0
  %v155 = vsel %vm141, %v137, 0
  %v158 = vsel %vm141, %v138, 0
  %v161 = vsel %vm141, %v139, 0
  %v164 = vsel %vm141, %v140, 0
  %166 = vmatpush.msra.mxu0 0.0
  %167 = vmatpush.msra.mxu0 0.0
  %168 = vmatpush.msra.mxu0 0.0
  %169 = vmatpush.msra.mxu0 0.0
  %170 = vmatpush.msra.mxu0 0.0
  %171 = vmatpush.msra.mxu0 0.0
  %172 = vmatpush.msra.mxu0 0.0
  %173 = vmatpush.msra.mxu0 0.0
  %174 = vmatpush.msra.mxu0 0.0
  %175 = vmatpush.msra.mxu0 0.0
  %176 = vmatpush.msra.mxu0 0.0
  %177 = vmatpush.msra.mxu0 0.0
  %178 = vmatpush.msra.mxu0 %v102
  %179 = vmatpush.msra.mxu0 %v99
  %180 = vmatpush.msra.mxu0 %v96
  %181 = vmatpush.msra.mxu0 %v93
  %182 = vmatmul.f32.gmra.mxu0 %v143
  %v183 = vpop.f32.mrf.mxu0
  %v184 = vadd.f32 0.0, %v183
  %185 = vmatmul.f32.gmra.mxu0 %v146
  %v186 = vpop.f32.mrf.mxu0
  %v187 = vadd.f32 0.0, %v186
  %188 = vmatmul.f32.gmra.mxu0 %v149
  %v189 = vpop.f32.mrf.mxu0
  %v190 = vadd.f32 0.0, %v189
  %191 = vmatmul.f32.gmra.mxu0 %v152
  %v192 = vpop.f32.mrf.mxu0
  %v193 = vadd.f32 0.0, %v192
  %194 = vmatmul.f32.gmra.mxu0 %v155
  %v195 = vpop.f32.mrf.mxu0
  %v196 = vadd.f32 0.0, %v195
  %197 = vmatmul.f32.gmra.mxu0 %v158
  %v198 = vpop.f32.mrf.mxu0
  %v199 = vadd.f32 0.0, %v198
  %200 = vmatmul.f32.gmra.mxu0 %v161
  %v201 = vpop.f32.mrf.mxu0
  %v202 = vadd.f32 0.0, %v201
  %203 = vmatmul.f32.gmra.mxu0 %v164
  %v204 = vpop.f32.mrf.mxu0
  %v205 = vadd.f32 0.0, %v204
  %206 = vdwg.mxu0
  %207 = vmatpush.msra.mxu0 0.0
  %208 = vmatpush.msra.mxu0 0.0
  %209 = vmatpush.msra.mxu0 0.0
  %210 = vmatpush.msra.mxu0 0.0
  %211 = vmatpush.msra.mxu0 0.0
  %212 = vmatpush.msra.mxu0 0.0
  %213 = vmatpush.msra.mxu0 0.0
  %214 = vmatpush.msra.mxu0 0.0
  %215 = vmatpush.msra.mxu0 0.0
  %216 = vmatpush.msra.mxu0 0.0
  %217 = vmatpush.msra.mxu0 0.0
  %218 = vmatpush.msra.mxu0 0.0
  %219 = vmatpush.msra.mxu0 %v131
  %220 = vmatpush.msra.mxu0 %v128
  %221 = vmatpush.msra.mxu0 %v125
  %222 = vmatpush.msra.mxu0 %v122
  %223 = vmatmul.f32.gmra.mxu0 %v143
  %v224 = vpop.f32.mrf.mxu0
  %v225 = vadd.f32 0.0, %v224
  %226 = vmatmul.f32.gmra.mxu0 %v146
  %v227 = vpop.f32.mrf.mxu0
  %v228 = vadd.f32 0.0, %v227
  %229 = vmatmul.f32.gmra.mxu0 %v149
  %v230 = vpop.f32.mrf.mxu0
  %v231 = vadd.f32 0.0, %v230
  %232 = vmatmul.f32.gmra.mxu0 %v152
  %v233 = vpop.f32.mrf.mxu0
  %v234 = vadd.f32 0.0, %v233
  %235 = vmatmul.f32.gmra.mxu0 %v155
  %v236 = vpop.f32.mrf.mxu0
  %v237 = vadd.f32 0.0, %v236
  %238 = vmatmul.f32.gmra.mxu0 %v158
  %v239 = vpop.f32.mrf.mxu0
  %v240 = vadd.f32 0.0, %v239
  %241 = vmatmul.f32.gmra.mxu0 %v161
  %v242 = vpop.f32.mrf.mxu0
  %v243 = vadd.f32 0.0, %v242
  %244 = vmatmul.f32.gmra.mxu0 %v164
  %v245 = vpop.f32.mrf.mxu0
  %v246 = vadd.f32 0.0, %v245
  %247 = vdwg.mxu0
  %248 = vst [vmem:[%s4] sm:$0xff] %v184
  %249 = vst [vmem:[%s4 + $0x8] sm:$0xff] %v225
  %250 = vst [vmem:[%s4 + $0x10] sm:$0xff] %v187
  %251 = vst [vmem:[%s4 + $0x18] sm:$0xff] %v228
  %252 = vst [vmem:[%s4 + $0x20] sm:$0xff] %v190
  %253 = vst [vmem:[%s4 + $0x28] sm:$0xff] %v231
  %254 = vst [vmem:[%s4 + $0x30] sm:$0xff] %v193
  %255 = vst [vmem:[%s4 + $0x38] sm:$0xff] %v234
  %256 = vst [vmem:[%s4 + $0x40] sm:$0xff] %v196
  %257 = vst [vmem:[%s4 + $0x48] sm:$0xff] %v237
  %258 = vst [vmem:[%s4 + $0x50] sm:$0xff] %v199
  %259 = vst [vmem:[%s4 + $0x58] sm:$0xff] %v240
  %260 = vst [vmem:[%s4 + $0x60] sm:$0xff] %v202
  %261 = vst [vmem:[%s4 + $0x68] sm:$0xff] %v243
  %262 = vst [vmem:[%s4 + $0x70] sm:$0xff] %v205
  %263 = vst [vmem:[%s4 + $0x78] sm:$0xff] %v246
  // Predicated region
  $region18: #{coupled_up_real_forward.5} parent=0 // pred_check
    _
  $region19: #{coupled_up_real_forward.5} parent=0 // pred_check_branch
    %265 = sbr.rel (0) target = $region21
  $region20: #{coupled_up_real_forward.5} parent=0 // pred_region
    _
  $region21: #{coupled_up_real_forward.5} parent=0 // pred_fallthru
    _
  // Predicated region
  $region22: #{coupled_up_real_forward.5} parent=0 // pred_check
    _
  $region23: #{coupled_up_real_forward.5} parent=0 // pred_check_branch
    %267 = sbr.rel (0) target = $region25
  $region24: #{coupled_up_real_forward.5} parent=0 // pred_region
    _
  $region25: #{coupled_up_real_forward.5} parent=0 // pred_fallthru
    _

</llo_original>
